<compile_context>
chip_gen: v7x
topology: tpu7x:2x2x1
jax: 0.10.0
libtpu: 0.0.40
codegen_flags: <defaults>
</compile_context>

<pallas_src>
import functools

import numpy as np
import jax
import jax.numpy as jnp
from jax.experimental import pallas as pl
from jax.experimental.pallas import tpu as pltpu


# ----------------------------------------------------------------------------
# Pallas kernel: one chunk of `chunk` LSTM timesteps per grid iteration.
# ----------------------------------------------------------------------------
def _lstm_chunk_kernel(len_ref, gx_ref, whh_ref, out_ref, hn_ref, cn_ref,
                       *, chunk, hidden, mxu_dtype):
    """Refs (B = padded batch, H = hidden):
      len_ref : (B, 1) int32            sequence lengths (original order)
      gx_ref  : (B, chunk*4H) gx_dtype  precomputed x@W_ih^T + b for this chunk
      whh_ref : (H, 4H) mxu_dtype       fused W_hh^T, gate order i,f,g,o
      out_ref : (B, chunk*H) f32        batch-major, lane-dense output chunk
      hn_ref  : (B, H) f32              resident hidden state (carry + final)
      cn_ref  : (B, H) f32              resident cell state   (carry + final)
    """
    H = hidden
    c_idx = pl.program_id(0)

    @pl.when(c_idx == 0)
    def _():
        hn_ref[...] = jnp.zeros_like(hn_ref)
        cn_ref[...] = jnp.zeros_like(cn_ref)

    h = hn_ref[...]                       # (B, H) f32, carried in vregs
    c = cn_ref[...]                       # (B, H) f32
    lens = len_ref[...]                   # (B, 1) int32
    whh = whh_ref[...]                    # (H, 4H) mxu_dtype

    # Static fully-unrolled per-chunk loop (chunk is small; gives the LLO
    # scheduler full visibility of the sequential dependency chain).
    for t in range(chunk):
        gt = c_idx * chunk + t            # global timestep
        # One fused (B,H)x(H,4H) MXU dot per step (was 4 separate dots).
        gates = (gx_ref[:, pl.ds(t * 4 * H, 4 * H)].astype(jnp.float32)
                 + jnp.dot(h.astype(mxu_dtype), whh,
                           preferred_element_type=jnp.float32))      # (B, 4H)
        i_g = jax.nn.sigmoid(gates[:, 0 * H:1 * H])
        f_g = jax.nn.sigmoid(gates[:, 1 * H:2 * H])
        g_g = jnp.tanh(gates[:, 2 * H:3 * H])
        o_g = jax.nn.sigmoid(gates[:, 3 * H:4 * H])

        c_new = f_g * c + i_g * g_g
        h_new = o_g * jnp.tanh(c_new)

        # TODO(synk): prefetch a per-tile min-length scalar and skip the three
        # selects for fully-valid chunks (pl.when) if VALU is the binding slot.
        valid = lens > gt                 # (B, 1) packed-sequence mask
        h = jnp.where(valid, h_new, h)
        c = jnp.where(valid, c_new, c)
        # Direct per-step store: keeps live vreg state at ~B*H, no concat.
        out_ref[:, pl.ds(t * H, H)] = jnp.where(valid, h_new, 0.0)

    # State carried across chunks via the resident output blocks.
    hn_ref[...] = h
    cn_ref[...] = c


def lstm_pallas(x, lengths, w_ih, w_hh, b_ih, b_hh, *,
                chunk=8, mxu_dtype=jnp.bfloat16, gx_dtype=jnp.float32):
    """x: (B, T, D) batch-first. Returns (out (B,T,H) f32, h_n (B,H), c_n (B,H)).

    mxu_dtype=bfloat16 (default): MXU operands (x/W_ih projection and h/W_hh
    recurrence) are cast to bf16; state / elementwise math stays f32.
    mxu_dtype=float32 gives a full-precision path.
    gx_dtype=bfloat16 halves gx HBM->VMEM streaming / VMEM (recommended on v7x).
    """
    B, T, D = x.shape
    H = w_hh.shape[1]
    H4 = 4 * H

    num_chunks = pl.cdiv(T, chunk)
    t_pad = num_chunks * chunk
    b_pad = -(-B // 8) * 8                # sublane-aligned batch

    # ---- Hoisted input projection: one big matmul over all timesteps (XLA) --
    bias = (b_ih + b_hh).astype(jnp.float32)                        # (4H,)
    x2d = x.reshape(B * T, D)
    if np.dtype(mxu_dtype) == np.dtype(jnp.float32):
        gx = jnp.dot(x2d.astype(jnp.float32), w_ih.astype(jnp.float32).T,
                     precision=jax.lax.Precision.HIGHEST)
    else:
        gx = jnp.dot(x2d.astype(mxu_dtype), w_ih.T.astype(mxu_dtype),
                     preferred_element_type=jnp.float32)
    gx = (gx + bias).reshape(B, T, H4).astype(gx_dtype)             # (B, T, 4H)

    # ---- Pad batch (sublanes) and time (chunk multiple); padded rows/steps
    #      are masked via length 0 / length < t. ------------------------------
    gx = jnp.pad(gx, ((0, b_pad - B), (0, t_pad - T), (0, 0)))
    gx = gx.reshape(b_pad, t_pad * H4)                              # lane-dense

    len2d = jnp.pad(lengths.astype(jnp.int32), (0, b_pad - B)).reshape(b_pad, 1)
    # Fused W_hh^T: (H, 4H), gate order i, f, g, o along lanes.
    whh_t = w_hh.T.astype(mxu_dtype)

    kernel = functools.partial(_lstm_chunk_kernel, chunk=chunk, hidden=H,
                               mxu_dtype=mxu_dtype)

    out_shapes = (
        jax.ShapeDtypeStruct((b_pad, t_pad * H), jnp.float32),      # out (batch-major)
        jax.ShapeDtypeStruct((b_pad, H), jnp.float32),              # h_n
        jax.ShapeDtypeStruct((b_pad, H), jnp.float32),              # c_n
    )

    # TODO(synk): for production-scale B on v7x, add a leading "parallel"
    # batch-tile grid axis (B_tile rows per core) to use the second TensorCore
    # and bound per-iteration VMEM.
    # TODO(synk): on v7x (64 MiB VMEM), single-buffer the constant-index W_hh /
    # lengths specs (pipeline_mode=pl.Buffered(1)) and set vmem_limit_bytes.
    # TODO(synk): for B << H, stage the fused W_hh in MXU weight registers once
    # per chunk (pltpu.matmul_push_rhs / matmul_acc_lhs / matmul_pop).
    # TODO(synk): pad H to a multiple of 128 (and mask) for vreg/MXU-dense
    # production shapes; demo shapes are left unpadded in the lane dimension.
    out_flat, h_n, c_n = pl.pallas_call(
        kernel,
        out_shape=out_shapes,
        grid_spec=pltpu.PrefetchScalarGridSpec(
            num_scalar_prefetch=0,
            grid=(num_chunks,),
            in_specs=[
                pl.BlockSpec((b_pad, 1), lambda c: (0, 0)),               # lengths
                pl.BlockSpec((b_pad, chunk * H4), lambda c: (0, c)),      # gates_x
                pl.BlockSpec((H, H4), lambda c: (0, 0)),                  # W_hh^T
            ],
            out_specs=(
                pl.BlockSpec((b_pad, chunk * H), lambda c: (0, c)),       # out chunk
                pl.BlockSpec((b_pad, H), lambda c: (0, 0)),               # h_n
                pl.BlockSpec((b_pad, H), lambda c: (0, 0)),               # c_n
            ),
        ),
        compiler_params=pltpu.CompilerParams(
            dimension_semantics=("arbitrary",)),   # time is sequential
    )(len2d, gx, whh_t)

    # Contiguous (free) reshape; strip batch/time padding.
    out = out_flat.reshape(b_pad, t_pad, H)[:B, :T]
    return out, h_n[:B], c_n[:B]


# ----------------------------------------------------------------------------
# RNN module forward (wrapper: parameter setup, layout glue, final selection)
# ----------------------------------------------------------------------------
def init_rnn_params(key, input_size, hidden_size):
    """PyTorch-style LSTM init: U(-1/sqrt(H), 1/sqrt(H)), gate order i,f,g,o."""
    k = 1.0 / jnp.sqrt(hidden_size)
    k1, k2, k3, k4 = jax.random.split(key, 4)
    w_ih = jax.random.uniform(k1, (4 * hidden_size, input_size), jnp.float32, -k, k)
    w_hh = jax.random.uniform(k2, (4 * hidden_size, hidden_size), jnp.float32, -k, k)
    b_ih = jax.random.uniform(k3, (4 * hidden_size,), jnp.float32, -k, k)
    b_hh = jax.random.uniform(k4, (4 * hidden_size,), jnp.float32, -k, k)
    return {"w_ih": w_ih, "w_hh": w_hh, "b_ih": b_ih, "b_hh": b_hh}


def rnn_forward(x, lengths, params, *, max_len=None, chunk=8,
                mxu_dtype=jnp.bfloat16, gx_dtype=jnp.float32):
    """Mirrors RNN.forward: returns (out, last_timestep, hidden).

    `max_len` (static int) reproduces pad_packed_sequence(total_length=
    lengths.max()); pass it from the host to avoid a device->host sync.
    """
    B, T, D = x.shape
    # pack (enforce_sorted=False): mmlatch reassigns `lengths` to the sorted
    # (descending) lengths before computing last_timestep — reproduced here.
    sorted_lengths = jnp.sort(lengths)[::-1]

    out, h_n, c_n = lstm_pallas(
        x, lengths, params["w_ih"], params["w_hh"],
        params["b_ih"], params["b_hh"],
        chunk=chunk, mxu_dtype=mxu_dtype, gx_dtype=gx_dtype)        # (B, T, H)

    # unpack pads only to max(lengths) (total_length=lengths.max()), statically.
    if max_len is not None:
        out = out[:, :max_len, :]

    # dropout(p=0) is identity.
    # _final_output (unidirectional): gather last unpadded token — uses the
    # (sorted) lengths, reproducing the original module's behaviour.
    last_timestep = out[jnp.arange(B), sorted_lengths - 1, :]       # (B, H)

    # merge_hidden_bi is identity for unidirectional.
    hidden = (h_n[None, ...], c_n[None, ...])                       # (1, B, H) each
    return out, last_timestep, hidden


# ----------------------------------------------------------------------------
# Pure-JAX reference (lax.scan, f32 HIGHEST) for correctness check
# ----------------------------------------------------------------------------
def lstm_ref(x, lengths, w_ih_t, w_hh_t, bias):
    B, T, D = x.shape
    H = w_hh_t.shape[0]
    hp = jax.lax.Precision.HIGHEST

    def step(carry, inp):
        h, c = carry
        x_t, t = inp
        gates = (jnp.dot(x_t, w_ih_t, precision=hp)
                 + jnp.dot(h, w_hh_t, precision=hp) + bias)
        i = jax.nn.sigmoid(gates[:, :H])
        f = jax.nn.sigmoid(gates[:, H:2 * H])
        g = jnp.tanh(gates[:, 2 * H:3 * H])
        o = jax.nn.sigmoid(gates[:, 3 * H:])
        c_new = f * c + i * g
        h_new = o * jnp.tanh(c_new)
        valid = (lengths > t)[:, None]
        h2 = jnp.where(valid, h_new, h)
        c2 = jnp.where(valid, c_new, c)
        out_t = jnp.where(valid, h_new, 0.0)
        return (h2, c2), out_t

    init = (jnp.zeros((B, H), jnp.float32), jnp.zeros((B, H), jnp.float32))
    (hN, cN), outs = jax.lax.scan(step, init,
                                  (jnp.swapaxes(x, 0, 1), jnp.arange(T)))
    return jnp.swapaxes(outs, 0, 1), hN, cN


if __name__ == "__main__":
    B, T, D, H = 2, 8, 16, 32

    key = jax.random.PRNGKey(0)
    kx, kp = jax.random.split(key)
    x = jax.random.normal(kx, (B, T, D), jnp.float32)
    lengths = jnp.array([8, 5], dtype=jnp.int32)   # sorted desc, max == T
    params = init_rnn_params(kp, D, H)
    max_len = T  # static (matches lengths.max() for this example)

    # Pure-JAX reference (f32, HIGHEST precision).
    ref_out, ref_hn, ref_cn = lstm_ref(
        x, lengths, params["w_ih"].T, params["w_hh"].T,
        params["b_ih"] + params["b_hh"])
    sorted_lengths = jnp.sort(lengths)[::-1]
    ref_last = ref_out[jnp.arange(B), sorted_lengths - 1, :]

    # 1) Full-precision path (mxu_dtype=f32): tight tolerance.
    fwd_f32 = jax.jit(functools.partial(rnn_forward, max_len=max_len, chunk=8,
                                        mxu_dtype=jnp.float32))
    out, last_timestep, hidden = fwd_f32(x, lengths, params)
    jax.block_until_ready((out, last_timestep, hidden))
    assert jnp.allclose(out, ref_out[:, :max_len], atol=1e-4), "out mismatch (f32)"
    assert jnp.allclose(hidden[0][0], ref_hn, atol=1e-4), "h_n mismatch (f32)"
    assert jnp.allclose(hidden[1][0], ref_cn, atol=1e-4), "c_n mismatch (f32)"
    assert jnp.allclose(last_timestep, ref_last, atol=1e-4), "last_timestep mismatch (f32)"

    # 2) Production path (default bf16 MXU operands): loose tolerance.
    fwd_bf16 = jax.jit(functools.partial(rnn_forward, max_len=max_len, chunk=8))
    out_b, last_b, hidden_b = fwd_bf16(x, lengths, params)
    jax.block_until_ready((out_b, last_b, hidden_b))
    assert jnp.allclose(out_b, ref_out[:, :max_len], rtol=5e-2, atol=5e-2), "out mismatch (bf16)"
    assert jnp.allclose(hidden_b[0][0], ref_hn, rtol=5e-2, atol=5e-2), "h_n mismatch (bf16)"
    assert jnp.allclose(hidden_b[1][0], ref_cn, rtol=5e-2, atol=5e-2), "c_n mismatch (bf16)"
    assert jnp.allclose(last_b, ref_last, rtol=5e-2, atol=5e-2), "last_timestep mismatch (bf16)"

    print("KERNEL_OK")
</pallas_src>

<mosaic_0001>
module attributes {stable_mosaic.version = 11 : i64} {
  func.func @_lstm_chunk_kernel(%arg0: i32, %arg1: memref<8x1xi32, #tpu.memory_space<vmem>>, %arg2: memref<8x1024xf32, #tpu.memory_space<vmem>>, %arg3: memref<32x128xf32, #tpu.memory_space<vmem>>, %arg4: memref<8x256xf32, #tpu.memory_space<vmem>>, %arg5: memref<8x32xf32, #tpu.memory_space<vmem>>, %arg6: memref<8x32xf32, #tpu.memory_space<vmem>>) attributes {dimension_semantics = [#tpu.dimension_semantics<arbitrary>], iteration_bounds = array<i64: 1>, scalar_prefetch = 0 : i64, scratch_operands = 0 : i64, tpu.core_type = #tpu.core_type<tc>, window_params = [{pipeline_mode = #tpu.pipeline_mode<synchronous>, transform_indices = @transform_0, window_bounds = array<i64: 8, 1>}, {transform_indices = @transform_1, window_bounds = array<i64: 8, 1024>}, {pipeline_mode = #tpu.pipeline_mode<synchronous>, transform_indices = @transform_2, window_bounds = array<i64: 32, 128>}, {transform_indices = @transform_3, window_bounds = array<i64: 8, 256>}, {pipeline_mode = #tpu.pipeline_mode<synchronous>, transform_indices = @transform_4, window_bounds = array<i64: 8, 32>}, {pipeline_mode = #tpu.pipeline_mode<synchronous>, transform_indices = @transform_5, window_bounds = array<i64: 8, 32>}]} {
    %c0_i32 = arith.constant 0 : i32
    %0 = arith.cmpi eq, %arg0, %c0_i32 : i32
    %1 = arith.extui %0 : i1 to i32
    %c0_i32_0 = arith.constant 0 : i32
    %2 = arith.cmpi ne, %1, %c0_i32_0 : i32
    scf.if %2 {
      %cst_78 = arith.constant 0.000000e+00 : f32
      %353 = vector.broadcast %cst_78 : f32 to vector<8x32xf32>
      %c0_79 = arith.constant 0 : index
      %c0_80 = arith.constant 0 : index
      %354 = vector.load %arg5[%c0_79, %c0_80] : memref<8x32xf32, #tpu.memory_space<vmem>>, vector<8x32xf32>
      tpu.vector_store %arg5[%c0_79, %c0_80], %353 {strides = array<i32>} : memref<8x32xf32, #tpu.memory_space<vmem>>, vector<8x32xf32>,
      %cst_81 = arith.constant 0.000000e+00 : f32
      %355 = vector.broadcast %cst_81 : f32 to vector<8x32xf32>
      %c0_82 = arith.constant 0 : index
      %c0_83 = arith.constant 0 : index
      %356 = vector.load %arg6[%c0_82, %c0_83] : memref<8x32xf32, #tpu.memory_space<vmem>>, vector<8x32xf32>
      tpu.vector_store %arg6[%c0_82, %c0_83], %355 {strides = array<i32>} : memref<8x32xf32, #tpu.memory_space<vmem>>, vector<8x32xf32>,
    } else {
    }
    %c0 = arith.constant 0 : index
    %c0_1 = arith.constant 0 : index
    %3 = vector.load %arg5[%c0, %c0_1] : memref<8x32xf32, #tpu.memory_space<vmem>>, vector<8x32xf32>
    %c0_2 = arith.constant 0 : index
    %c0_3 = arith.constant 0 : index
    %4 = vector.load %arg6[%c0_2, %c0_3] : memref<8x32xf32, #tpu.memory_space<vmem>>, vector<8x32xf32>
    %c0_4 = arith.constant 0 : index
    %c0_5 = arith.constant 0 : index
    %5 = vector.load %arg1[%c0_4, %c0_5] : memref<8x1xi32, #tpu.memory_space<vmem>>, vector<8x1xi32>
    %c0_6 = arith.constant 0 : index
    %c0_7 = arith.constant 0 : index
    %6 = vector.load %arg3[%c0_6, %c0_7] : memref<32x128xf32, #tpu.memory_space<vmem>>, vector<32x128xf32>
    %c8_i32 = arith.constant 8 : i32
    %7 = arith.muli %arg0, %c8_i32 : i32
    %c0_i32_8 = arith.constant 0 : i32
    %8 = arith.addi %7, %c0_i32_8 : i32
    %c0_9 = arith.constant 0 : index
    %c0_10 = arith.constant 0 : index
    %9 = vector.load %arg2[%c0_9, %c0_10] : memref<8x1024xf32, #tpu.memory_space<vmem>>, vector<8x128xf32>
    %cst = arith.constant dense<0.000000e+00> : vector<8x128xf32>
    %10 = tpu.matmul %3, %6, %cst {dimension_numbers = #tpu.dot_dimension_numbers<[1], [0], [0], [1], [0, 0, 1, 1], [], []>} : vector<8x32xf32>, vector<32x128xf32>, vector<8x128xf32> -> vector<8x128xf32>
    %11 = arith.addf %9, %10 : vector<8x128xf32>
    %12 = vector.extract_strided_slice %11 {offsets = [0, 0], sizes = [8, 32], strides = [1, 1]} : vector<8x128xf32> to vector<8x32xf32>
    %13 = arith.negf %12 : vector<8x32xf32>
    %14 = math.exp %13 : vector<8x32xf32>
    %cst_11 = arith.constant 1.000000e+00 : f32
    %15 = vector.broadcast %cst_11 : f32 to vector<8x32xf32>
    %16 = arith.addf %15, %14 : vector<8x32xf32>
    %17 = arith.divf %15, %16 : vector<8x32xf32>
    %18 = vector.extract_strided_slice %11 {offsets = [0, 32], sizes = [8, 32], strides = [1, 1]} : vector<8x128xf32> to vector<8x32xf32>
    %19 = arith.negf %18 : vector<8x32xf32>
    %20 = math.exp %19 : vector<8x32xf32>
    %cst_12 = arith.constant 1.000000e+00 : f32
    %21 = vector.broadcast %cst_12 : f32 to vector<8x32xf32>
    %22 = arith.addf %21, %20 : vector<8x32xf32>
    %23 = arith.divf %21, %22 : vector<8x32xf32>
    %24 = vector.extract_strided_slice %11 {offsets = [0, 64], sizes = [8, 32], strides = [1, 1]} : vector<8x128xf32> to vector<8x32xf32>
    %25 = math.tanh %24 : vector<8x32xf32>
    %26 = vector.extract_strided_slice %11 {offsets = [0, 96], sizes = [8, 32], strides = [1, 1]} : vector<8x128xf32> to vector<8x32xf32>
    %27 = arith.negf %26 : vector<8x32xf32>
    %28 = math.exp %27 : vector<8x32xf32>
    %cst_13 = arith.constant 1.000000e+00 : f32
    %29 = vector.broadcast %cst_13 : f32 to vector<8x32xf32>
    %30 = arith.addf %29, %28 : vector<8x32xf32>
    %31 = arith.divf %29, %30 : vector<8x32xf32>
    %32 = arith.mulf %23, %4 : vector<8x32xf32>
    %33 = arith.mulf %17, %25 : vector<8x32xf32>
    %34 = arith.addf %32, %33 : vector<8x32xf32>
    %35 = math.tanh %34 : vector<8x32xf32>
    %36 = arith.mulf %31, %35 : vector<8x32xf32>
    %37 = vector.broadcast %8 : i32 to vector<8x1xi32>
    %38 = arith.cmpi sgt, %5, %37 : vector<8x1xi32>
    %39 = vector.shape_cast %38 : vector<8x1xi1> to vector<8x1xi1>
    %40 = vector.broadcast %39 : vector<8x1xi1> to vector<8x32xi1>
    %41 = arith.select %40, %36, %3 : vector<8x32xi1>, vector<8x32xf32>
    %42 = vector.shape_cast %38 : vector<8x1xi1> to vector<8x1xi1>
    %43 = vector.broadcast %42 : vector<8x1xi1> to vector<8x32xi1>
    %44 = arith.select %43, %34, %4 : vector<8x32xi1>, vector<8x32xf32>
    %cst_14 = arith.constant 0.000000e+00 : f32
    %45 = vector.shape_cast %38 : vector<8x1xi1> to vector<8x1xi1>
    %46 = vector.broadcast %45 : vector<8x1xi1> to vector<8x32xi1>
    %47 = vector.broadcast %cst_14 : f32 to vector<8x32xf32>
    %48 = arith.select %46, %36, %47 : vector<8x32xi1>, vector<8x32xf32>
    %c0_15 = arith.constant 0 : index
    %c0_16 = arith.constant 0 : index
    %49 = vector.load %arg4[%c0_15, %c0_16] : memref<8x256xf32, #tpu.memory_space<vmem>>, vector<8x32xf32>
    tpu.vector_store %arg4[%c0_15, %c0_16], %48 {strides = array<i32>} : memref<8x256xf32, #tpu.memory_space<vmem>>, vector<8x32xf32>,
    %c8_i32_17 = arith.constant 8 : i32
    %50 = arith.muli %arg0, %c8_i32_17 : i32
    %c1_i32 = arith.constant 1 : i32
    %51 = arith.addi %50, %c1_i32 : i32
    %c0_18 = arith.constant 0 : index
    %c128 = arith.constant 128 : index
    %52 = vector.load %arg2[%c0_18, %c128] : memref<8x1024xf32, #tpu.memory_space<vmem>>, vector<8x128xf32>
    %cst_19 = arith.constant dense<0.000000e+00> : vector<8x128xf32>
    %53 = tpu.matmul %41, %6, %cst_19 {dimension_numbers = #tpu.dot_dimension_numbers<[1], [0], [0], [1], [0, 0, 1, 1], [], []>} : vector<8x32xf32>, vector<32x128xf32>, vector<8x128xf32> -> vector<8x128xf32>
    %54 = arith.addf %52, %53 : vector<8x128xf32>
    %55 = vector.extract_strided_slice %54 {offsets = [0, 0], sizes = [8, 32], strides = [1, 1]} : vector<8x128xf32> to vector<8x32xf32>
    %56 = arith.negf %55 : vector<8x32xf32>
    %57 = math.exp %56 : vector<8x32xf32>
    %cst_20 = arith.constant 1.000000e+00 : f32
    %58 = vector.broadcast %cst_20 : f32 to vector<8x32xf32>
    %59 = arith.addf %58, %57 : vector<8x32xf32>
    %60 = arith.divf %58, %59 : vector<8x32xf32>
    %61 = vector.extract_strided_slice %54 {offsets = [0, 32], sizes = [8, 32], strides = [1, 1]} : vector<8x128xf32> to vector<8x32xf32>
    %62 = arith.negf %61 : vector<8x32xf32>
    %63 = math.exp %62 : vector<8x32xf32>
    %cst_21 = arith.constant 1.000000e+00 : f32
    %64 = vector.broadcast %cst_21 : f32 to vector<8x32xf32>
    %65 = arith.addf %64, %63 : vector<8x32xf32>
    %66 = arith.divf %64, %65 : vector<8x32xf32>
    %67 = vector.extract_strided_slice %54 {offsets = [0, 64], sizes = [8, 32], strides = [1, 1]} : vector<8x128xf32> to vector<8x32xf32>
    %68 = math.tanh %67 : vector<8x32xf32>
    %69 = vector.extract_strided_slice %54 {offsets = [0, 96], sizes = [8, 32], strides = [1, 1]} : vector<8x128xf32> to vector<8x32xf32>
    %70 = arith.negf %69 : vector<8x32xf32>
    %71 = math.exp %70 : vector<8x32xf32>
    %cst_22 = arith.constant 1.000000e+00 : f32
    %72 = vector.broadcast %cst_22 : f32 to vector<8x32xf32>
    %73 = arith.addf %72, %71 : vector<8x32xf32>
    %74 = arith.divf %72, %73 : vector<8x32xf32>
    %75 = arith.mulf %66, %44 : vector<8x32xf32>
    %76 = arith.mulf %60, %68 : vector<8x32xf32>
    %77 = arith.addf %75, %76 : vector<8x32xf32>
    %78 = math.tanh %77 : vector<8x32xf32>
    %79 = arith.mulf %74, %78 : vector<8x32xf32>
    %80 = vector.broadcast %51 : i32 to vector<8x1xi32>
    %81 = arith.cmpi sgt, %5, %80 : vector<8x1xi32>
    %82 = vector.shape_cast %81 : vector<8x1xi1> to vector<8x1xi1>
    %83 = vector.broadcast %82 : vector<8x1xi1> to vector<8x32xi1>
    %84 = arith.select %83, %79, %41 : vector<8x32xi1>, vector<8x32xf32>
    %85 = vector.shape_cast %81 : vector<8x1xi1> to vector<8x1xi1>
    %86 = vector.broadcast %85 : vector<8x1xi1> to vector<8x32xi1>
    %87 = arith.select %86, %77, %44 : vector<8x32xi1>, vector<8x32xf32>
    %cst_23 = arith.constant 0.000000e+00 : f32
    %88 = vector.shape_cast %81 : vector<8x1xi1> to vector<8x1xi1>
    %89 = vector.broadcast %88 : vector<8x1xi1> to vector<8x32xi1>
    %90 = vector.broadcast %cst_23 : f32 to vector<8x32xf32>
    %91 = arith.select %89, %79, %90 : vector<8x32xi1>, vector<8x32xf32>
    %c0_24 = arith.constant 0 : index
    %c32 = arith.constant 32 : index
    %92 = vector.load %arg4[%c0_24, %c32] : memref<8x256xf32, #tpu.memory_space<vmem>>, vector<8x32xf32>
    tpu.vector_store %arg4[%c0_24, %c32], %91 {strides = array<i32>} : memref<8x256xf32, #tpu.memory_space<vmem>>, vector<8x32xf32>,
    %c8_i32_25 = arith.constant 8 : i32
    %93 = arith.muli %arg0, %c8_i32_25 : i32
    %c2_i32 = arith.constant 2 : i32
    %94 = arith.addi %93, %c2_i32 : i32
    %c0_26 = arith.constant 0 : index
    %c256 = arith.constant 256 : index
    %95 = vector.load %arg2[%c0_26, %c256] : memref<8x1024xf32, #tpu.memory_space<vmem>>, vector<8x128xf32>
    %cst_27 = arith.constant dense<0.000000e+00> : vector<8x128xf32>
    %96 = tpu.matmul %84, %6, %cst_27 {dimension_numbers = #tpu.dot_dimension_numbers<[1], [0], [0], [1], [0, 0, 1, 1], [], []>} : vector<8x32xf32>, vector<32x128xf32>, vector<8x128xf32> -> vector<8x128xf32>
    %97 = arith.addf %95, %96 : vector<8x128xf32>
    %98 = vector.extract_strided_slice %97 {offsets = [0, 0], sizes = [8, 32], strides = [1, 1]} : vector<8x128xf32> to vector<8x32xf32>
    %99 = arith.negf %98 : vector<8x32xf32>
    %100 = math.exp %99 : vector<8x32xf32>
    %cst_28 = arith.constant 1.000000e+00 : f32
    %101 = vector.broadcast %cst_28 : f32 to vector<8x32xf32>
    %102 = arith.addf %101, %100 : vector<8x32xf32>
    %103 = arith.divf %101, %102 : vector<8x32xf32>
    %104 = vector.extract_strided_slice %97 {offsets = [0, 32], sizes = [8, 32], strides = [1, 1]} : vector<8x128xf32> to vector<8x32xf32>
    %105 = arith.negf %104 : vector<8x32xf32>
    %106 = math.exp %105 : vector<8x32xf32>
    %cst_29 = arith.constant 1.000000e+00 : f32
    %107 = vector.broadcast %cst_29 : f32 to vector<8x32xf32>
    %108 = arith.addf %107, %106 : vector<8x32xf32>
    %109 = arith.divf %107, %108 : vector<8x32xf32>
    %110 = vector.extract_strided_slice %97 {offsets = [0, 64], sizes = [8, 32], strides = [1, 1]} : vector<8x128xf32> to vector<8x32xf32>
    %111 = math.tanh %110 : vector<8x32xf32>
    %112 = vector.extract_strided_slice %97 {offsets = [0, 96], sizes = [8, 32], strides = [1, 1]} : vector<8x128xf32> to vector<8x32xf32>
    %113 = arith.negf %112 : vector<8x32xf32>
    %114 = math.exp %113 : vector<8x32xf32>
    %cst_30 = arith.constant 1.000000e+00 : f32
    %115 = vector.broadcast %cst_30 : f32 to vector<8x32xf32>
    %116 = arith.addf %115, %114 : vector<8x32xf32>
    %117 = arith.divf %115, %116 : vector<8x32xf32>
    %118 = arith.mulf %109, %87 : vector<8x32xf32>
    %119 = arith.mulf %103, %111 : vector<8x32xf32>
    %120 = arith.addf %118, %119 : vector<8x32xf32>
    %121 = math.tanh %120 : vector<8x32xf32>
    %122 = arith.mulf %117, %121 : vector<8x32xf32>
    %123 = vector.broadcast %94 : i32 to vector<8x1xi32>
    %124 = arith.cmpi sgt, %5, %123 : vector<8x1xi32>
    %125 = vector.shape_cast %124 : vector<8x1xi1> to vector<8x1xi1>
    %126 = vector.broadcast %125 : vector<8x1xi1> to vector<8x32xi1>
    %127 = arith.select %126, %122, %84 : vector<8x32xi1>, vector<8x32xf32>
    %128 = vector.shape_cast %124 : vector<8x1xi1> to vector<8x1xi1>
    %129 = vector.broadcast %128 : vector<8x1xi1> to vector<8x32xi1>
    %130 = arith.select %129, %120, %87 : vector<8x32xi1>, vector<8x32xf32>
    %cst_31 = arith.constant 0.000000e+00 : f32
    %131 = vector.shape_cast %124 : vector<8x1xi1> to vector<8x1xi1>
    %132 = vector.broadcast %131 : vector<8x1xi1> to vector<8x32xi1>
    %133 = vector.broadcast %cst_31 : f32 to vector<8x32xf32>
    %134 = arith.select %132, %122, %133 : vector<8x32xi1>, vector<8x32xf32>
    %c0_32 = arith.constant 0 : index
    %c64 = arith.constant 64 : index
    %135 = vector.load %arg4[%c0_32, %c64] : memref<8x256xf32, #tpu.memory_space<vmem>>, vector<8x32xf32>
    tpu.vector_store %arg4[%c0_32, %c64], %134 {strides = array<i32>} : memref<8x256xf32, #tpu.memory_space<vmem>>, vector<8x32xf32>,
    %c8_i32_33 = arith.constant 8 : i32
    %136 = arith.muli %arg0, %c8_i32_33 : i32
    %c3_i32 = arith.constant 3 : i32
    %137 = arith.addi %136, %c3_i32 : i32
    %c0_34 = arith.constant 0 : index
    %c384 = arith.constant 384 : index
    %138 = vector.load %arg2[%c0_34, %c384] : memref<8x1024xf32, #tpu.memory_space<vmem>>, vector<8x128xf32>
    %cst_35 = arith.constant dense<0.000000e+00> : vector<8x128xf32>
    %139 = tpu.matmul %127, %6, %cst_35 {dimension_numbers = #tpu.dot_dimension_numbers<[1], [0], [0], [1], [0, 0, 1, 1], [], []>} : vector<8x32xf32>, vector<32x128xf32>, vector<8x128xf32> -> vector<8x128xf32>
    %140 = arith.addf %138, %139 : vector<8x128xf32>
    %141 = vector.extract_strided_slice %140 {offsets = [0, 0], sizes = [8, 32], strides = [1, 1]} : vector<8x128xf32> to vector<8x32xf32>
    %142 = arith.negf %141 : vector<8x32xf32>
    %143 = math.exp %142 : vector<8x32xf32>
    %cst_36 = arith.constant 1.000000e+00 : f32
    %144 = vector.broadcast %cst_36 : f32 to vector<8x32xf32>
    %145 = arith.addf %144, %143 : vector<8x32xf32>
    %146 = arith.divf %144, %145 : vector<8x32xf32>
    %147 = vector.extract_strided_slice %140 {offsets = [0, 32], sizes = [8, 32], strides = [1, 1]} : vector<8x128xf32> to vector<8x32xf32>
    %148 = arith.negf %147 : vector<8x32xf32>
    %149 = math.exp %148 : vector<8x32xf32>
    %cst_37 = arith.constant 1.000000e+00 : f32
    %150 = vector.broadcast %cst_37 : f32 to vector<8x32xf32>
    %151 = arith.addf %150, %149 : vector<8x32xf32>
    %152 = arith.divf %150, %151 : vector<8x32xf32>
    %153 = vector.extract_strided_slice %140 {offsets = [0, 64], sizes = [8, 32], strides = [1, 1]} : vector<8x128xf32> to vector<8x32xf32>
    %154 = math.tanh %153 : vector<8x32xf32>
    %155 = vector.extract_strided_slice %140 {offsets = [0, 96], sizes = [8, 32], strides = [1, 1]} : vector<8x128xf32> to vector<8x32xf32>
    %156 = arith.negf %155 : vector<8x32xf32>
    %157 = math.exp %156 : vector<8x32xf32>
    %cst_38 = arith.constant 1.000000e+00 : f32
    %158 = vector.broadcast %cst_38 : f32 to vector<8x32xf32>
    %159 = arith.addf %158, %157 : vector<8x32xf32>
    %160 = arith.divf %158, %159 : vector<8x32xf32>
    %161 = arith.mulf %152, %130 : vector<8x32xf32>
    %162 = arith.mulf %146, %154 : vector<8x32xf32>
    %163 = arith.addf %161, %162 : vector<8x32xf32>
    %164 = math.tanh %163 : vector<8x32xf32>
    %165 = arith.mulf %160, %164 : vector<8x32xf32>
    %166 = vector.broadcast %137 : i32 to vector<8x1xi32>
    %167 = arith.cmpi sgt, %5, %166 : vector<8x1xi32>
    %168 = vector.shape_cast %167 : vector<8x1xi1> to vector<8x1xi1>
    %169 = vector.broadcast %168 : vector<8x1xi1> to vector<8x32xi1>
    %170 = arith.select %169, %165, %127 : vector<8x32xi1>, vector<8x32xf32>
    %171 = vector.shape_cast %167 : vector<8x1xi1> to vector<8x1xi1>
    %172 = vector.broadcast %171 : vector<8x1xi1> to vector<8x32xi1>
    %173 = arith.select %172, %163, %130 : vector<8x32xi1>, vector<8x32xf32>
    %cst_39 = arith.constant 0.000000e+00 : f32
    %174 = vector.shape_cast %167 : vector<8x1xi1> to vector<8x1xi1>
    %175 = vector.broadcast %174 : vector<8x1xi1> to vector<8x32xi1>
    %176 = vector.broadcast %cst_39 : f32 to vector<8x32xf32>
    %177 = arith.select %175, %165, %176 : vector<8x32xi1>, vector<8x32xf32>
    %c0_40 = arith.constant 0 : index
    %c96 = arith.constant 96 : index
    %178 = vector.load %arg4[%c0_40, %c96] : memref<8x256xf32, #tpu.memory_space<vmem>>, vector<8x32xf32>
    tpu.vector_store %arg4[%c0_40, %c96], %177 {strides = array<i32>} : memref<8x256xf32, #tpu.memory_space<vmem>>, vector<8x32xf32>,
    %c8_i32_41 = arith.constant 8 : i32
    %179 = arith.muli %arg0, %c8_i32_41 : i32
    %c4_i32 = arith.constant 4 : i32
    %180 = arith.addi %179, %c4_i32 : i32
    %c0_42 = arith.constant 0 : index
    %c512 = arith.constant 512 : index
    %181 = vector.load %arg2[%c0_42, %c512] : memref<8x1024xf32, #tpu.memory_space<vmem>>, vector<8x128xf32>
    %cst_43 = arith.constant dense<0.000000e+00> : vector<8x128xf32>
    %182 = tpu.matmul %170, %6, %cst_43 {dimension_numbers = #tpu.dot_dimension_numbers<[1], [0], [0], [1], [0, 0, 1, 1], [], []>} : vector<8x32xf32>, vector<32x128xf32>, vector<8x128xf32> -> vector<8x128xf32>
    %183 = arith.addf %181, %182 : vector<8x128xf32>
    %184 = vector.extract_strided_slice %183 {offsets = [0, 0], sizes = [8, 32], strides = [1, 1]} : vector<8x128xf32> to vector<8x32xf32>
    %185 = arith.negf %184 : vector<8x32xf32>
    %186 = math.exp %185 : vector<8x32xf32>
    %cst_44 = arith.constant 1.000000e+00 : f32
    %187 = vector.broadcast %cst_44 : f32 to vector<8x32xf32>
    %188 = arith.addf %187, %186 : vector<8x32xf32>
    %189 = arith.divf %187, %188 : vector<8x32xf32>
    %190 = vector.extract_strided_slice %183 {offsets = [0, 32], sizes = [8, 32], strides = [1, 1]} : vector<8x128xf32> to vector<8x32xf32>
    %191 = arith.negf %190 : vector<8x32xf32>
    %192 = math.exp %191 : vector<8x32xf32>
    %cst_45 = arith.constant 1.000000e+00 : f32
    %193 = vector.broadcast %cst_45 : f32 to vector<8x32xf32>
    %194 = arith.addf %193, %192 : vector<8x32xf32>
    %195 = arith.divf %193, %194 : vector<8x32xf32>
    %196 = vector.extract_strided_slice %183 {offsets = [0, 64], sizes = [8, 32], strides = [1, 1]} : vector<8x128xf32> to vector<8x32xf32>
    %197 = math.tanh %196 : vector<8x32xf32>
    %198 = vector.extract_strided_slice %183 {offsets = [0, 96], sizes = [8, 32], strides = [1, 1]} : vector<8x128xf32> to vector<8x32xf32>
    %199 = arith.negf %198 : vector<8x32xf32>
    %200 = math.exp %199 : vector<8x32xf32>
    %cst_46 = arith.constant 1.000000e+00 : f32
    %201 = vector.broadcast %cst_46 : f32 to vector<8x32xf32>
    %202 = arith.addf %201, %200 : vector<8x32xf32>
    %203 = arith.divf %201, %202 : vector<8x32xf32>
    %204 = arith.mulf %195, %173 : vector<8x32xf32>
    %205 = arith.mulf %189, %197 : vector<8x32xf32>
    %206 = arith.addf %204, %205 : vector<8x32xf32>
    %207 = math.tanh %206 : vector<8x32xf32>
    %208 = arith.mulf %203, %207 : vector<8x32xf32>
    %209 = vector.broadcast %180 : i32 to vector<8x1xi32>
    %210 = arith.cmpi sgt, %5, %209 : vector<8x1xi32>
    %211 = vector.shape_cast %210 : vector<8x1xi1> to vector<8x1xi1>
    %212 = vector.broadcast %211 : vector<8x1xi1> to vector<8x32xi1>
    %213 = arith.select %212, %208, %170 : vector<8x32xi1>, vector<8x32xf32>
    %214 = vector.shape_cast %210 : vector<8x1xi1> to vector<8x1xi1>
    %215 = vector.broadcast %214 : vector<8x1xi1> to vector<8x32xi1>
    %216 = arith.select %215, %206, %173 : vector<8x32xi1>, vector<8x32xf32>
    %cst_47 = arith.constant 0.000000e+00 : f32
    %217 = vector.shape_cast %210 : vector<8x1xi1> to vector<8x1xi1>
    %218 = vector.broadcast %217 : vector<8x1xi1> to vector<8x32xi1>
    %219 = vector.broadcast %cst_47 : f32 to vector<8x32xf32>
    %220 = arith.select %218, %208, %219 : vector<8x32xi1>, vector<8x32xf32>
    %c0_48 = arith.constant 0 : index
    %c128_49 = arith.constant 128 : index
    %221 = vector.load %arg4[%c0_48, %c128_49] : memref<8x256xf32, #tpu.memory_space<vmem>>, vector<8x32xf32>
    tpu.vector_store %arg4[%c0_48, %c128_49], %220 {strides = array<i32>} : memref<8x256xf32, #tpu.memory_space<vmem>>, vector<8x32xf32>,
    %c8_i32_50 = arith.constant 8 : i32
    %222 = arith.muli %arg0, %c8_i32_50 : i32
    %c5_i32 = arith.constant 5 : i32
    %223 = arith.addi %222, %c5_i32 : i32
    %c0_51 = arith.constant 0 : index
    %c640 = arith.constant 640 : index
    %224 = vector.load %arg2[%c0_51, %c640] : memref<8x1024xf32, #tpu.memory_space<vmem>>, vector<8x128xf32>
    %cst_52 = arith.constant dense<0.000000e+00> : vector<8x128xf32>
    %225 = tpu.matmul %213, %6, %cst_52 {dimension_numbers = #tpu.dot_dimension_numbers<[1], [0], [0], [1], [0, 0, 1, 1], [], []>} : vector<8x32xf32>, vector<32x128xf32>, vector<8x128xf32> -> vector<8x128xf32>
    %226 = arith.addf %224, %225 : vector<8x128xf32>
    %227 = vector.extract_strided_slice %226 {offsets = [0, 0], sizes = [8, 32], strides = [1, 1]} : vector<8x128xf32> to vector<8x32xf32>
    %228 = arith.negf %227 : vector<8x32xf32>
    %229 = math.exp %228 : vector<8x32xf32>
    %cst_53 = arith.constant 1.000000e+00 : f32
    %230 = vector.broadcast %cst_53 : f32 to vector<8x32xf32>
    %231 = arith.addf %230, %229 : vector<8x32xf32>
    %232 = arith.divf %230, %231 : vector<8x32xf32>
    %233 = vector.extract_strided_slice %226 {offsets = [0, 32], sizes = [8, 32], strides = [1, 1]} : vector<8x128xf32> to vector<8x32xf32>
    %234 = arith.negf %233 : vector<8x32xf32>
    %235 = math.exp %234 : vector<8x32xf32>
    %cst_54 = arith.constant 1.000000e+00 : f32
    %236 = vector.broadcast %cst_54 : f32 to vector<8x32xf32>
    %237 = arith.addf %236, %235 : vector<8x32xf32>
    %238 = arith.divf %236, %237 : vector<8x32xf32>
    %239 = vector.extract_strided_slice %226 {offsets = [0, 64], sizes = [8, 32], strides = [1, 1]} : vector<8x128xf32> to vector<8x32xf32>
    %240 = math.tanh %239 : vector<8x32xf32>
    %241 = vector.extract_strided_slice %226 {offsets = [0, 96], sizes = [8, 32], strides = [1, 1]} : vector<8x128xf32> to vector<8x32xf32>
    %242 = arith.negf %241 : vector<8x32xf32>
    %243 = math.exp %242 : vector<8x32xf32>
    %cst_55 = arith.constant 1.000000e+00 : f32
    %244 = vector.broadcast %cst_55 : f32 to vector<8x32xf32>
    %245 = arith.addf %244, %243 : vector<8x32xf32>
    %246 = arith.divf %244, %245 : vector<8x32xf32>
    %247 = arith.mulf %238, %216 : vector<8x32xf32>
    %248 = arith.mulf %232, %240 : vector<8x32xf32>
    %249 = arith.addf %247, %248 : vector<8x32xf32>
    %250 = math.tanh %249 : vector<8x32xf32>
    %251 = arith.mulf %246, %250 : vector<8x32xf32>
    %252 = vector.broadcast %223 : i32 to vector<8x1xi32>
    %253 = arith.cmpi sgt, %5, %252 : vector<8x1xi32>
    %254 = vector.shape_cast %253 : vector<8x1xi1> to vector<8x1xi1>
    %255 = vector.broadcast %254 : vector<8x1xi1> to vector<8x32xi1>
    %256 = arith.select %255, %251, %213 : vector<8x32xi1>, vector<8x32xf32>
    %257 = vector.shape_cast %253 : vector<8x1xi1> to vector<8x1xi1>
    %258 = vector.broadcast %257 : vector<8x1xi1> to vector<8x32xi1>
    %259 = arith.select %258, %249, %216 : vector<8x32xi1>, vector<8x32xf32>
    %cst_56 = arith.constant 0.000000e+00 : f32
    %260 = vector.shape_cast %253 : vector<8x1xi1> to vector<8x1xi1>
    %261 = vector.broadcast %260 : vector<8x1xi1> to vector<8x32xi1>
    %262 = vector.broadcast %cst_56 : f32 to vector<8x32xf32>
    %263 = arith.select %261, %251, %262 : vector<8x32xi1>, vector<8x32xf32>
    %c0_57 = arith.constant 0 : index
    %c160 = arith.constant 160 : index
    %264 = vector.load %arg4[%c0_57, %c160] : memref<8x256xf32, #tpu.memory_space<vmem>>, vector<8x32xf32>
    tpu.vector_store %arg4[%c0_57, %c160], %263 {strides = array<i32>} : memref<8x256xf32, #tpu.memory_space<vmem>>, vector<8x32xf32>,
    %c8_i32_58 = arith.constant 8 : i32
    %265 = arith.muli %arg0, %c8_i32_58 : i32
    %c6_i32 = arith.constant 6 : i32
    %266 = arith.addi %265, %c6_i32 : i32
    %c0_59 = arith.constant 0 : index
    %c768 = arith.constant 768 : index
    %267 = vector.load %arg2[%c0_59, %c768] : memref<8x1024xf32, #tpu.memory_space<vmem>>, vector<8x128xf32>
    %cst_60 = arith.constant dense<0.000000e+00> : vector<8x128xf32>
    %268 = tpu.matmul %256, %6, %cst_60 {dimension_numbers = #tpu.dot_dimension_numbers<[1], [0], [0], [1], [0, 0, 1, 1], [], []>} : vector<8x32xf32>, vector<32x128xf32>, vector<8x128xf32> -> vector<8x128xf32>
    %269 = arith.addf %267, %268 : vector<8x128xf32>
    %270 = vector.extract_strided_slice %269 {offsets = [0, 0], sizes = [8, 32], strides = [1, 1]} : vector<8x128xf32> to vector<8x32xf32>
    %271 = arith.negf %270 : vector<8x32xf32>
    %272 = math.exp %271 : vector<8x32xf32>
    %cst_61 = arith.constant 1.000000e+00 : f32
    %273 = vector.broadcast %cst_61 : f32 to vector<8x32xf32>
    %274 = arith.addf %273, %272 : vector<8x32xf32>
    %275 = arith.divf %273, %274 : vector<8x32xf32>
    %276 = vector.extract_strided_slice %269 {offsets = [0, 32], sizes = [8, 32], strides = [1, 1]} : vector<8x128xf32> to vector<8x32xf32>
    %277 = arith.negf %276 : vector<8x32xf32>
    %278 = math.exp %277 : vector<8x32xf32>
    %cst_62 = arith.constant 1.000000e+00 : f32
    %279 = vector.broadcast %cst_62 : f32 to vector<8x32xf32>
    %280 = arith.addf %279, %278 : vector<8x32xf32>
    %281 = arith.divf %279, %280 : vector<8x32xf32>
    %282 = vector.extract_strided_slice %269 {offsets = [0, 64], sizes = [8, 32], strides = [1, 1]} : vector<8x128xf32> to vector<8x32xf32>
    %283 = math.tanh %282 : vector<8x32xf32>
    %284 = vector.extract_strided_slice %269 {offsets = [0, 96], sizes = [8, 32], strides = [1, 1]} : vector<8x128xf32> to vector<8x32xf32>
    %285 = arith.negf %284 : vector<8x32xf32>
    %286 = math.exp %285 : vector<8x32xf32>
    %cst_63 = arith.constant 1.000000e+00 : f32
    %287 = vector.broadcast %cst_63 : f32 to vector<8x32xf32>
    %288 = arith.addf %287, %286 : vector<8x32xf32>
    %289 = arith.divf %287, %288 : vector<8x32xf32>
    %290 = arith.mulf %281, %259 : vector<8x32xf32>
    %291 = arith.mulf %275, %283 : vector<8x32xf32>
    %292 = arith.addf %290, %291 : vector<8x32xf32>
    %293 = math.tanh %292 : vector<8x32xf32>
    %294 = arith.mulf %289, %293 : vector<8x32xf32>
    %295 = vector.broadcast %266 : i32 to vector<8x1xi32>
    %296 = arith.cmpi sgt, %5, %295 : vector<8x1xi32>
    %297 = vector.shape_cast %296 : vector<8x1xi1> to vector<8x1xi1>
    %298 = vector.broadcast %297 : vector<8x1xi1> to vector<8x32xi1>
    %299 = arith.select %298, %294, %256 : vector<8x32xi1>, vector<8x32xf32>
    %300 = vector.shape_cast %296 : vector<8x1xi1> to vector<8x1xi1>
    %301 = vector.broadcast %300 : vector<8x1xi1> to vector<8x32xi1>
    %302 = arith.select %301, %292, %259 : vector<8x32xi1>, vector<8x32xf32>
    %cst_64 = arith.constant 0.000000e+00 : f32
    %303 = vector.shape_cast %296 : vector<8x1xi1> to vector<8x1xi1>
    %304 = vector.broadcast %303 : vector<8x1xi1> to vector<8x32xi1>
    %305 = vector.broadcast %cst_64 : f32 to vector<8x32xf32>
    %306 = arith.select %304, %294, %305 : vector<8x32xi1>, vector<8x32xf32>
    %c0_65 = arith.constant 0 : index
    %c192 = arith.constant 192 : index
    %307 = vector.load %arg4[%c0_65, %c192] : memref<8x256xf32, #tpu.memory_space<vmem>>, vector<8x32xf32>
    tpu.vector_store %arg4[%c0_65, %c192], %306 {strides = array<i32>} : memref<8x256xf32, #tpu.memory_space<vmem>>, vector<8x32xf32>,
    %c8_i32_66 = arith.constant 8 : i32
    %308 = arith.muli %arg0, %c8_i32_66 : i32
    %c7_i32 = arith.constant 7 : i32
    %309 = arith.addi %308, %c7_i32 : i32
    %c0_67 = arith.constant 0 : index
    %c896 = arith.constant 896 : index
    %310 = vector.load %arg2[%c0_67, %c896] : memref<8x1024xf32, #tpu.memory_space<vmem>>, vector<8x128xf32>
    %cst_68 = arith.constant dense<0.000000e+00> : vector<8x128xf32>
    %311 = tpu.matmul %299, %6, %cst_68 {dimension_numbers = #tpu.dot_dimension_numbers<[1], [0], [0], [1], [0, 0, 1, 1], [], []>} : vector<8x32xf32>, vector<32x128xf32>, vector<8x128xf32> -> vector<8x128xf32>
    %312 = arith.addf %310, %311 : vector<8x128xf32>
    %313 = vector.extract_strided_slice %312 {offsets = [0, 0], sizes = [8, 32], strides = [1, 1]} : vector<8x128xf32> to vector<8x32xf32>
    %314 = arith.negf %313 : vector<8x32xf32>
    %315 = math.exp %314 : vector<8x32xf32>
    %cst_69 = arith.constant 1.000000e+00 : f32
    %316 = vector.broadcast %cst_69 : f32 to vector<8x32xf32>
    %317 = arith.addf %316, %315 : vector<8x32xf32>
    %318 = arith.divf %316, %317 : vector<8x32xf32>
    %319 = vector.extract_strided_slice %312 {offsets = [0, 32], sizes = [8, 32], strides = [1, 1]} : vector<8x128xf32> to vector<8x32xf32>
    %320 = arith.negf %319 : vector<8x32xf32>
    %321 = math.exp %320 : vector<8x32xf32>
    %cst_70 = arith.constant 1.000000e+00 : f32
    %322 = vector.broadcast %cst_70 : f32 to vector<8x32xf32>
    %323 = arith.addf %322, %321 : vector<8x32xf32>
    %324 = arith.divf %322, %323 : vector<8x32xf32>
    %325 = vector.extract_strided_slice %312 {offsets = [0, 64], sizes = [8, 32], strides = [1, 1]} : vector<8x128xf32> to vector<8x32xf32>
    %326 = math.tanh %325 : vector<8x32xf32>
    %327 = vector.extract_strided_slice %312 {offsets = [0, 96], sizes = [8, 32], strides = [1, 1]} : vector<8x128xf32> to vector<8x32xf32>
    %328 = arith.negf %327 : vector<8x32xf32>
    %329 = math.exp %328 : vector<8x32xf32>
    %cst_71 = arith.constant 1.000000e+00 : f32
    %330 = vector.broadcast %cst_71 : f32 to vector<8x32xf32>
    %331 = arith.addf %330, %329 : vector<8x32xf32>
    %332 = arith.divf %330, %331 : vector<8x32xf32>
    %333 = arith.mulf %324, %302 : vector<8x32xf32>
    %334 = arith.mulf %318, %326 : vector<8x32xf32>
    %335 = arith.addf %333, %334 : vector<8x32xf32>
    %336 = math.tanh %335 : vector<8x32xf32>
    %337 = arith.mulf %332, %336 : vector<8x32xf32>
    %338 = vector.broadcast %309 : i32 to vector<8x1xi32>
    %339 = arith.cmpi sgt, %5, %338 : vector<8x1xi32>
    %340 = vector.shape_cast %339 : vector<8x1xi1> to vector<8x1xi1>
    %341 = vector.broadcast %340 : vector<8x1xi1> to vector<8x32xi1>
    %342 = arith.select %341, %337, %299 : vector<8x32xi1>, vector<8x32xf32>
    %343 = vector.shape_cast %339 : vector<8x1xi1> to vector<8x1xi1>
    %344 = vector.broadcast %343 : vector<8x1xi1> to vector<8x32xi1>
    %345 = arith.select %344, %335, %302 : vector<8x32xi1>, vector<8x32xf32>
    %cst_72 = arith.constant 0.000000e+00 : f32
    %346 = vector.shape_cast %339 : vector<8x1xi1> to vector<8x1xi1>
    %347 = vector.broadcast %346 : vector<8x1xi1> to vector<8x32xi1>
    %348 = vector.broadcast %cst_72 : f32 to vector<8x32xf32>
    %349 = arith.select %347, %337, %348 : vector<8x32xi1>, vector<8x32xf32>
    %c0_73 = arith.constant 0 : index
    %c224 = arith.constant 224 : index
    %350 = vector.load %arg4[%c0_73, %c224] : memref<8x256xf32, #tpu.memory_space<vmem>>, vector<8x32xf32>
    tpu.vector_store %arg4[%c0_73, %c224], %349 {strides = array<i32>} : memref<8x256xf32, #tpu.memory_space<vmem>>, vector<8x32xf32>,
    %c0_74 = arith.constant 0 : index
    %c0_75 = arith.constant 0 : index
    %351 = vector.load %arg5[%c0_74, %c0_75] : memref<8x32xf32, #tpu.memory_space<vmem>>, vector<8x32xf32>
    tpu.vector_store %arg5[%c0_74, %c0_75], %342 {strides = array<i32>} : memref<8x32xf32, #tpu.memory_space<vmem>>, vector<8x32xf32>,
    %c0_76 = arith.constant 0 : index
    %c0_77 = arith.constant 0 : index
    %352 = vector.load %arg6[%c0_76, %c0_77] : memref<8x32xf32, #tpu.memory_space<vmem>>, vector<8x32xf32>
    tpu.vector_store %arg6[%c0_76, %c0_77], %345 {strides = array<i32>} : memref<8x32xf32, #tpu.memory_space<vmem>>, vector<8x32xf32>,
    return
  }
  func.func @transform_0(%arg0: i32) -> (i32, i32) {
    %c0_i32 = arith.constant 0 : i32
    %c0_i32_0 = arith.constant 0 : i32
    %c0_i32_1 = arith.constant 0 : i32
    return %c0_i32, %c0_i32_0 : i32, i32
  }
  func.func @transform_1(%arg0: i32) -> (i32, i32) {
    %c0_i32 = arith.constant 0 : i32
    %c0_i32_0 = arith.constant 0 : i32
    return %c0_i32, %arg0 : i32, i32
  }
  func.func @transform_2(%arg0: i32) -> (i32, i32) {
    %c0_i32 = arith.constant 0 : i32
    %c0_i32_0 = arith.constant 0 : i32
    %c0_i32_1 = arith.constant 0 : i32
    return %c0_i32, %c0_i32_0 : i32, i32
  }
  func.func @transform_3(%arg0: i32) -> (i32, i32) {
    %c0_i32 = arith.constant 0 : i32
    %c0_i32_0 = arith.constant 0 : i32
    return %c0_i32, %arg0 : i32, i32
  }
  func.func @transform_4(%arg0: i32) -> (i32, i32) {
    %c0_i32 = arith.constant 0 : i32
    %c0_i32_0 = arith.constant 0 : i32
    %c0_i32_1 = arith.constant 0 : i32
    return %c0_i32, %c0_i32_0 : i32, i32
  }
  func.func @transform_5(%arg0: i32) -> (i32, i32) {
    %c0_i32 = arith.constant 0 : i32
    %c0_i32_0 = arith.constant 0 : i32
    %c0_i32_1 = arith.constant 0 : i32
    return %c0_i32, %c0_i32_0 : i32, i32
  }
}

</mosaic_0001>

<llo_original>
// kernel: rnn_forward.1
$region0: #{rnn_forward.1}
  #allocation0 [shape = 'u32[]', space=smem, size = 0x4, offset = 0x4, fixed_abs, tag = 'smem constant byte address 0x4 - core index']
  #allocation1 [shape = 'u32[144,128]{1,0:T(1,128)}', space=vmem, size = 0x12000, scoped, tag = 'internal scratch']
  %s0 = inlined_call_operand.vmem [shape: s32[8,1], index: 0, kind: input, shape index: {}]
  %s1 = inlined_call_operand.vmem [shape: f32[8,1024], index: 1, kind: input, shape index: {}]
  %s2 = inlined_call_operand.vmem [shape: f32[32,128], index: 2, kind: input, shape index: {}]
  %s3 = inlined_call_operand.vmem [shape: f32[8,256], index: 3, kind: output, shape index: {0}]
  %s4 = inlined_call_operand.vmem [shape: f32[8,32], index: 4, kind: output, shape index: {1}]
  %s5 = inlined_call_operand.vmem [shape: f32[8,32], index: 5, kind: output, shape index: {2}]
  %6 = xla_tuple %s3, %s4, %s5
  %s7 = sld [smem:[#allocation0]]
  $region42: #{rnn_forward.1} parent=0
    _
  %s9 = ssub.s32 1, %s7
  %s10 = scalar_select 0, %s9, %s7
  // Predicated region
  $region2: #{rnn_forward.1} parent=0 // pred_check
    _
  $region3: #{rnn_forward.1} parent=0 // pred_check_branch
    %12 = sbr.rel (0) target = $region5
  $region4: #{rnn_forward.1} parent=0 // pred_region
    _
  $region5: #{rnn_forward.1} parent=0 // pred_fallthru
    _
  // Predicated region
  $region6: #{rnn_forward.1} parent=0 // pred_check
    _
  $region7: #{rnn_forward.1} parent=0 // pred_check_branch
    %14 = sbr.rel (0) target = $region9
  $region8: #{rnn_forward.1} parent=0 // pred_region
    _
  $region9: #{rnn_forward.1} parent=0 // pred_fallthru
    _
  // Predicated region
  $region10: #{rnn_forward.1} parent=0 // pred_check
    _
  $region11: #{rnn_forward.1} parent=0 // pred_check_branch
    %16 = sbr.rel (0) target = $region13
  $region12: #{rnn_forward.1} parent=0 // pred_region
    _
  $region13: #{rnn_forward.1} parent=0 // pred_fallthru
    _
  %p17 = scmp.eq.s32.totalorder 0, 0
  // Predicated region
  $region14: #{rnn_forward.1} parent=0 // pred_check
    %p18 = pneg %p17
  $region15: #{rnn_forward.1} parent=0 // pred_check_branch
    %20 = sbr.rel (%p18) target = $region17
  $region16: #{rnn_forward.1} parent=0 // pred_region
    %vm21 = vcmask 261120
    %22 = vst.msk [vmem:[%s4] sm:$0xff] %vm21, 0.0
    %23 = vst.msk [vmem:[%s5] sm:$0xff] %vm21, 0.0
  $region17: #{rnn_forward.1} parent=0 // pred_fallthru
    _
  %v24 = vld [vmem:[%s4] sm:$0xff]
  %v25 = vld [vmem:[%s5] sm:$0xff]
  %v26 = vld [vmem:[%s0] sm:$0xff]
  %v27 = vld [vmem:[%s2] sm:$0xff]
  %v28 = vld [vmem:[%s2 + $0x8] sm:$0xff]
  %v29 = vld [vmem:[%s2 + $0x10] sm:$0xff]
  %v30 = vld [vmem:[%s2 + $0x18] sm:$0xff]
  %s31 = smul.u32 0, 8
  %v32 = vld [vmem:[%s1] sm:$0xff]
  %vm33 = vcmask 261120
  %v35 = vsel %vm33, %v24, 0
  %37 = vmatprep.subr.mxu0 0.0
  %38 = vmatpush1.msra.mxu0 %v27
  %39 = vmatprep.subr.mxu0 0.0
  %40 = vmatpush1.msra.mxu0 %v28
  %41 = vmatprep.subr.mxu0 0.0
  %42 = vmatpush1.msra.mxu0 %v29
  %43 = vmatprep.subr.mxu0 0.0
  %44 = vmatpush1.msra.mxu0 %v30
  %45 = vmatprep.subr.mxu0 0.0
  %46 = vmatpush1.msra.mxu0 0.0
  %47 = vmatprep.subr.mxu0 0.0
  %48 = vmatpush1.msra.mxu0 0.0
  %49 = vmatprep.subr.mxu0 0.0
  %50 = vmatpush1.msra.mxu0 0.0
  %51 = vmatprep.subr.mxu0 0.0
  %52 = vmatpush1.msra.mxu0 0.0
  %53 = vmatprep.subr.mxu0 0.0
  %54 = vmatpush1.msra.mxu0 0.0
  %55 = vmatprep.subr.mxu0 0.0
  %56 = vmatpush1.msra.mxu0 0.0
  %57 = vmatprep.subr.mxu0 0.0
  %58 = vmatpush1.msra.mxu0 0.0
  %59 = vmatprep.subr.mxu0 0.0
  %60 = vmatpush1.msra.mxu0 0.0
  %61 = vmatprep.subr.mxu0 0.0
  %62 = vmatpush1.msra.mxu0 0.0
  %63 = vmatprep.subr.mxu0 0.0
  %64 = vmatpush1.msra.mxu0 0.0
  %65 = vmatprep.subr.mxu0 0.0
  %66 = vmatpush1.msra.mxu0 0.0
  %67 = vmatprep.subr.mxu0 0.0
  %68 = vmatpush1.msra.mxu0 0.0
  %69 = vmatprep.subr.mxu0 0.0
  %70 = vmatpush1.msra.mxu0 0.0
  %71 = vmatprep.subr.mxu0 0.0
  %72 = vmatpush1.msra.mxu0 0.0
  %73 = vmatprep.subr.mxu0 0.0
  %74 = vmatpush1.msra.mxu0 0.0
  %75 = vmatprep.subr.mxu0 0.0
  %76 = vmatpush1.msra.mxu0 0.0
  %77 = vmatprep.subr.mxu0 0.0
  %78 = vmatpush1.msra.mxu0 0.0
  %79 = vmatprep.subr.mxu0 0.0
  %80 = vmatpush1.msra.mxu0 0.0
  %81 = vmatprep.subr.mxu0 0.0
  %82 = vmatpush1.msra.mxu0 0.0
  %83 = vmatprep.subr.mxu0 0.0
  %84 = vmatpush1.msra.mxu0 0.0
  %85 = vmatprep.subr.mxu0 0.0
  %86 = vmatpush1.msra.mxu0 0.0
  %87 = vmatprep.subr.mxu0 0.0
  %88 = vmatpush1.msra.mxu0 0.0
  %89 = vmatprep.subr.mxu0 0.0
  %90 = vmatpush1.msra.mxu0 0.0
  %91 = vmatprep.subr.mxu0 0.0
  %92 = vmatpush1.msra.mxu0 0.0
  %93 = vmatprep.subr.mxu0 0.0
  %94 = vmatpush1.msra.mxu0 0.0
  %95 = vmatprep.subr.mxu0 0.0
  %96 = vmatpush1.msra.mxu0 0.0
  %97 = vmatprep.subr.mxu0 0.0
  %98 = vmatpush1.msra.mxu0 0.0
  %99 = vmatprep.subr.mxu0 0.0
  %100 = vmatpush1.msra.mxu0 0.0
  %101 = vmatprep.mubr.f32.mxu0 0.0
  %102 = vmatmul.mubr.f32.gmra.mrb[0].mxu0 %v35
  %v103 = vpop.f32.mrb[0].mxu0
  %v104 = vadd.f32 0.0, %v103
  %v105 = vpop.f32.mrb[0].mxu0
  %106 = vdwg.mxu0
  %v107 = vadd.f32 %v32, %v104
  %v108 = vxor.u32 %v107, 2147483648
  %v109 = vmul.f32 %v108, 1.442695
  %v110 = vpow.pop %v109
  %v111 = vadd.f32 %v110, 1.0
  %v112 = vrcp.pop %v111
  %v113 = vmul.f32 1.0, %v112
  %v114 = vtanh.pop %v107
  %116 = vrot.lane.b32.xlu0 %v25, 32
  %v117 = vpop.permute.xlu0 %116
  %v119 = vmul.f32 %v113, %v117
  %121 = vrot.lane.b32.xlu0 %v114, 64
  %v122 = vpop.permute.xlu0 %121
  %v124 = vmul.f32 %v113, %v122
  %126 = vrot.lane.b32.xlu0 %v124, 32
  %v127 = vpop.permute.xlu0 %126
  %v129 = vadd.f32 %v119, %v127
  %v130 = vtanh.pop %v129
  %132 = vrot.lane.b32.xlu0 %v130, 64
  %v133 = vpop.permute.xlu0 %132
  %v135 = vmul.f32 %v113, %v133
  %v136 = vstv %s31
  %vm137 = vcmp.gt.s32.totalorder %v26, %v136
  %v138 = vsel %vm137, 1, 0
  %139 = vset.pattern.permute.xlu0 0
  %140 = vperm.xlu0 %139, %v138
  %v141 = vpop.permute.xlu0 %140
  %vm142 = vcmp.eq.s32.totalorder %v141, 1
  %143 = vrot.lane.b32.xlu0 %v24, 96
  %v144 = vpop.permute.xlu0 %143
  %v146 = vsel %vm142, %v135, %v144
  %v147 = vsel %vm142, %v129, %v117
  %v148 = vsel %vm142, %v135, 0.0
  %150 = vrot.lane.b32.xlu0 %v148, 32
  %v151 = vpop.permute.xlu0 %150
  %153 = vst.msk [vmem:[%s3] sm:$0xff] %vm33, %v151
  %s154 = sadd.s32 %s31, 1
  %v155 = vld [vmem:[%s1 + $0x8] sm:$0xff]
  %157 = vrot.lane.b32.xlu0 %v146, 32
  %v158 = vpop.permute.xlu0 %157
  %v159 = vsel %vm33, %v158, 0
  %161 = vmatprep.subr.mxu0 0.0
  %162 = vmatpush1.msra.mxu0 %v27
  %163 = vmatprep.subr.mxu0 0.0
  %164 = vmatpush1.msra.mxu0 %v28
  %165 = vmatprep.subr.mxu0 0.0
  %166 = vmatpush1.msra.mxu0 %v29
  %167 = vmatprep.subr.mxu0 0.0
  %168 = vmatpush1.msra.mxu0 %v30
  %169 = vmatprep.subr.mxu0 0.0
  %170 = vmatpush1.msra.mxu0 0.0
  %171 = vmatprep.subr.mxu0 0.0
  %172 = vmatpush1.msra.mxu0 0.0
  %173 = vmatprep.subr.mxu0 0.0
  %174 = vmatpush1.msra.mxu0 0.0
  %175 = vmatprep.subr.mxu0 0.0
  %176 = vmatpush1.msra.mxu0 0.0
  %177 = vmatprep.subr.mxu0 0.0
  %178 = vmatpush1.msra.mxu0 0.0
  %179 = vmatprep.subr.mxu0 0.0
  %180 = vmatpush1.msra.mxu0 0.0
  %181 = vmatprep.subr.mxu0 0.0
  %182 = vmatpush1.msra.mxu0 0.0
  %183 = vmatprep.subr.mxu0 0.0
  %184 = vmatpush1.msra.mxu0 0.0
  %185 = vmatprep.subr.mxu0 0.0
  %186 = vmatpush1.msra.mxu0 0.0
  %187 = vmatprep.subr.mxu0 0.0
  %188 = vmatpush1.msra.mxu0 0.0
  %189 = vmatprep.subr.mxu0 0.0
  %190 = vmatpush1.msra.mxu0 0.0
  %191 = vmatprep.subr.mxu0 0.0
  %192 = vmatpush1.msra.mxu0 0.0
  %193 = vmatprep.subr.mxu0 0.0
  %194 = vmatpush1.msra.mxu0 0.0
  %195 = vmatprep.subr.mxu0 0.0
  %196 = vmatpush1.msra.mxu0 0.0
  %197 = vmatprep.subr.mxu0 0.0
  %198 = vmatpush1.msra.mxu0 0.0
  %199 = vmatprep.subr.mxu0 0.0
  %200 = vmatpush1.msra.mxu0 0.0
  %201 = vmatprep.subr.mxu0 0.0
  %202 = vmatpush1.msra.mxu0 0.0
  %203 = vmatprep.subr.mxu0 0.0
  %204 = vmatpush1.msra.mxu0 0.0
  %205 = vmatprep.subr.mxu0 0.0
  %206 = vmatpush1.msra.mxu0 0.0
  %207 = vmatprep.subr.mxu0 0.0
  %208 = vmatpush1.msra.mxu0 0.0
  %209 = vmatprep.subr.mxu0 0.0
  %210 = vmatpush1.msra.mxu0 0.0
  %211 = vmatprep.subr.mxu0 0.0
  %212 = vmatpush1.msra.mxu0 0.0
  %213 = vmatprep.subr.mxu0 0.0
  %214 = vmatpush1.msra.mxu0 0.0
  %215 = vmatprep.subr.mxu0 0.0
  %216 = vmatpush1.msra.mxu0 0.0
  %217 = vmatprep.subr.mxu0 0.0
  %218 = vmatpush1.msra.mxu0 0.0
  %219 = vmatprep.subr.mxu0 0.0
  %220 = vmatpush1.msra.mxu0 0.0
  %221 = vmatprep.subr.mxu0 0.0
  %222 = vmatpush1.msra.mxu0 0.0
  %223 = vmatprep.subr.mxu0 0.0
  %224 = vmatpush1.msra.mxu0 0.0
  %225 = vmatprep.mubr.f32.mxu0 0.0
  %226 = vmatmul.mubr.f32.gmra.mrb[0].mxu0 %v159
  %v227 = vpop.f32.mrb[0].mxu0
  %v228 = vadd.f32 0.0, %v227
  %v229 = vpop.f32.mrb[0].mxu0
  %230 = vdwg.mxu0
  %v231 = vadd.f32 %v155, %v228
  %v232 = vxor.u32 %v231, 2147483648
  %v233 = vmul.f32 %v232, 1.442695
  %v234 = vpow.pop %v233
  %v235 = vadd.f32 %v234, 1.0
  %v236 = vrcp.pop %v235
  %v237 = vmul.f32 1.0, %v236
  %v238 = vtanh.pop %v231
  %v239 = vmul.f32 %v237, %v147
  %241 = vrot.lane.b32.xlu0 %v238, 64
  %v242 = vpop.permute.xlu0 %241
  %v244 = vmul.f32 %v237, %v242
  %246 = vrot.lane.b32.xlu0 %v244, 32
  %v247 = vpop.permute.xlu0 %246
  %v249 = vadd.f32 %v239, %v247
  %v250 = vtanh.pop %v249
  %252 = vrot.lane.b32.xlu0 %v250, 64
  %v253 = vpop.permute.xlu0 %252
  %v255 = vmul.f32 %v237, %v253
  %v256 = vstv %s154
  %vm257 = vcmp.gt.s32.totalorder %v26, %v256
  %v258 = vsel %vm257, 1, 0
  %259 = vset.pattern.permute.xlu0 0
  %260 = vperm.xlu0 %259, %v258
  %v261 = vpop.permute.xlu0 %260
  %vm262 = vcmp.eq.s32.totalorder %v261, 1
  %v263 = vsel %vm262, %v255, %v146
  %v264 = vsel %vm262, %v249, %v147
  %v265 = vsel %vm262, %v255, 0.0
  %267 = vrot.lane.b32.xlu0 %v265, 64
  %v268 = vpop.permute.xlu0 %267
  %vm270 = vcmask 523520
  %271 = vst.msk [vmem:[%s3] sm:$0xff] %vm270, %v268
  %s272 = sadd.s32 %s31, 2
  %v273 = vld [vmem:[%s1 + $0x10] sm:$0xff]
  %275 = vrot.lane.b32.xlu0 %v263, 32
  %v276 = vpop.permute.xlu0 %275
  %v277 = vsel %vm33, %v276, 0
  %279 = vmatprep.subr.mxu0 0.0
  %280 = vmatpush1.msra.mxu0 %v27
  %281 = vmatprep.subr.mxu0 0.0
  %282 = vmatpush1.msra.mxu0 %v28
  %283 = vmatprep.subr.mxu0 0.0
  %284 = vmatpush1.msra.mxu0 %v29
  %285 = vmatprep.subr.mxu0 0.0
  %286 = vmatpush1.msra.mxu0 %v30
  %287 = vmatprep.subr.mxu0 0.0
  %288 = vmatpush1.msra.mxu0 0.0
  %289 = vmatprep.subr.mxu0 0.0
  %290 = vmatpush1.msra.mxu0 0.0
  %291 = vmatprep.subr.mxu0 0.0
  %292 = vmatpush1.msra.mxu0 0.0
  %293 = vmatprep.subr.mxu0 0.0
  %294 = vmatpush1.msra.mxu0 0.0
  %295 = vmatprep.subr.mxu0 0.0
  %296 = vmatpush1.msra.mxu0 0.0
  %297 = vmatprep.subr.mxu0 0.0
  %298 = vmatpush1.msra.mxu0 0.0
  %299 = vmatprep.subr.mxu0 0.0
  %300 = vmatpush1.msra.mxu0 0.0
  %301 = vmatprep.subr.mxu0 0.0
  %302 = vmatpush1.msra.mxu0 0.0
  %303 = vmatprep.subr.mxu0 0.0
  %304 = vmatpush1.msra.mxu0 0.0
  %305 = vmatprep.subr.mxu0 0.0
  %306 = vmatpush1.msra.mxu0 0.0
  %307 = vmatprep.subr.mxu0 0.0
  %308 = vmatpush1.msra.mxu0 0.0
  %309 = vmatprep.subr.mxu0 0.0
  %310 = vmatpush1.msra.mxu0 0.0
  %311 = vmatprep.subr.mxu0 0.0
  %312 = vmatpush1.msra.mxu0 0.0
  %313 = vmatprep.subr.mxu0 0.0
  %314 = vmatpush1.msra.mxu0 0.0
  %315 = vmatprep.subr.mxu0 0.0
  %316 = vmatpush1.msra.mxu0 0.0
  %317 = vmatprep.subr.mxu0 0.0
  %318 = vmatpush1.msra.mxu0 0.0
  %319 = vmatprep.subr.mxu0 0.0
  %320 = vmatpush1.msra.mxu0 0.0
  %321 = vmatprep.subr.mxu0 0.0
  %322 = vmatpush1.msra.mxu0 0.0
  %323 = vmatprep.subr.mxu0 0.0
  %324 = vmatpush1.msra.mxu0 0.0
  %325 = vmatprep.subr.mxu0 0.0
  %326 = vmatpush1.msra.mxu0 0.0
  %327 = vmatprep.subr.mxu0 0.0
  %328 = vmatpush1.msra.mxu0 0.0
  %329 = vmatprep.subr.mxu0 0.0
  %330 = vmatpush1.msra.mxu0 0.0
  %331 = vmatprep.subr.mxu0 0.0
  %332 = vmatpush1.msra.mxu0 0.0
  %333 = vmatprep.subr.mxu0 0.0
  %334 = vmatpush1.msra.mxu0 0.0
  %335 = vmatprep.subr.mxu0 0.0
  %336 = vmatpush1.msra.mxu0 0.0
  %337 = vmatprep.subr.mxu0 0.0
  %338 = vmatpush1.msra.mxu0 0.0
  %339 = vmatprep.subr.mxu0 0.0
  %340 = vmatpush1.msra.mxu0 0.0
  %341 = vmatprep.subr.mxu0 0.0
  %342 = vmatpush1.msra.mxu0 0.0
  %343 = vmatprep.mubr.f32.mxu0 0.0
  %344 = vmatmul.mubr.f32.gmra.mrb[0].mxu0 %v277
  %v345 = vpop.f32.mrb[0].mxu0
  %v346 = vadd.f32 0.0, %v345
  %v347 = vpop.f32.mrb[0].mxu0
  %348 = vdwg.mxu0
  %v349 = vadd.f32 %v273, %v346
  %v350 = vxor.u32 %v349, 2147483648
  %v351 = vmul.f32 %v350, 1.442695
  %v352 = vpow.pop %v351
  %v353 = vadd.f32 %v352, 1.0
  %v354 = vrcp.pop %v353
  %v355 = vmul.f32 1.0, %v354
  %v356 = vtanh.pop %v349
  %v357 = vmul.f32 %v355, %v264
  %359 = vrot.lane.b32.xlu0 %v356, 64
  %v360 = vpop.permute.xlu0 %359
  %v362 = vmul.f32 %v355, %v360
  %364 = vrot.lane.b32.xlu0 %v362, 32
  %v365 = vpop.permute.xlu0 %364
  %v367 = vadd.f32 %v357, %v365
  %v368 = vtanh.pop %v367
  %370 = vrot.lane.b32.xlu0 %v368, 64
  %v371 = vpop.permute.xlu0 %370
  %v373 = vmul.f32 %v355, %v371
  %v374 = vstv %s272
  %vm375 = vcmp.gt.s32.totalorder %v26, %v374
  %v376 = vsel %vm375, 1, 0
  %377 = vset.pattern.permute.xlu0 0
  %378 = vperm.xlu0 %377, %v376
  %v379 = vpop.permute.xlu0 %378
  %vm380 = vcmp.eq.s32.totalorder %v379, 1
  %v381 = vsel %vm380, %v373, %v263
  %v382 = vsel %vm380, %v367, %v264
  %v383 = vsel %vm380, %v373, 0.0
  %385 = vrot.lane.b32.xlu0 %v383, 96
  %v386 = vpop.permute.xlu0 %385
  %vm388 = vcmask 785920
  %389 = vst.msk [vmem:[%s3] sm:$0xff] %vm388, %v386
  %s390 = sadd.s32 %s31, 3
  %v391 = vld [vmem:[%s1 + $0x18] sm:$0xff]
  %393 = vrot.lane.b32.xlu0 %v381, 32
  %v394 = vpop.permute.xlu0 %393
  %v395 = vsel %vm33, %v394, 0
  %397 = vmatprep.subr.mxu0 0.0
  %398 = vmatpush1.msra.mxu0 %v27
  %399 = vmatprep.subr.mxu0 0.0
  %400 = vmatpush1.msra.mxu0 %v28
  %401 = vmatprep.subr.mxu0 0.0
  %402 = vmatpush1.msra.mxu0 %v29
  %403 = vmatprep.subr.mxu0 0.0
  %404 = vmatpush1.msra.mxu0 %v30
  %405 = vmatprep.subr.mxu0 0.0
  %406 = vmatpush1.msra.mxu0 0.0
  %407 = vmatprep.subr.mxu0 0.0
  %408 = vmatpush1.msra.mxu0 0.0
  %409 = vmatprep.subr.mxu0 0.0
  %410 = vmatpush1.msra.mxu0 0.0
  %411 = vmatprep.subr.mxu0 0.0
  %412 = vmatpush1.msra.mxu0 0.0
  %413 = vmatprep.subr.mxu0 0.0
  %414 = vmatpush1.msra.mxu0 0.0
  %415 = vmatprep.subr.mxu0 0.0
  %416 = vmatpush1.msra.mxu0 0.0
  %417 = vmatprep.subr.mxu0 0.0
  %418 = vmatpush1.msra.mxu0 0.0
  %419 = vmatprep.subr.mxu0 0.0
  %420 = vmatpush1.msra.mxu0 0.0
  %421 = vmatprep.subr.mxu0 0.0
  %422 = vmatpush1.msra.mxu0 0.0
  %423 = vmatprep.subr.mxu0 0.0
  %424 = vmatpush1.msra.mxu0 0.0
  %425 = vmatprep.subr.mxu0 0.0
  %426 = vmatpush1.msra.mxu0 0.0
  %427 = vmatprep.subr.mxu0 0.0
  %428 = vmatpush1.msra.mxu0 0.0
  %429 = vmatprep.subr.mxu0 0.0
  %430 = vmatpush1.msra.mxu0 0.0
  %431 = vmatprep.subr.mxu0 0.0
  %432 = vmatpush1.msra.mxu0 0.0
  %433 = vmatprep.subr.mxu0 0.0
  %434 = vmatpush1.msra.mxu0 0.0
  %435 = vmatprep.subr.mxu0 0.0
  %436 = vmatpush1.msra.mxu0 0.0
  %437 = vmatprep.subr.mxu0 0.0
  %438 = vmatpush1.msra.mxu0 0.0
  %439 = vmatprep.subr.mxu0 0.0
  %440 = vmatpush1.msra.mxu0 0.0
  %441 = vmatprep.subr.mxu0 0.0
  %442 = vmatpush1.msra.mxu0 0.0
  %443 = vmatprep.subr.mxu0 0.0
  %444 = vmatpush1.msra.mxu0 0.0
  %445 = vmatprep.subr.mxu0 0.0
  %446 = vmatpush1.msra.mxu0 0.0
  %447 = vmatprep.subr.mxu0 0.0
  %448 = vmatpush1.msra.mxu0 0.0
  %449 = vmatprep.subr.mxu0 0.0
  %450 = vmatpush1.msra.mxu0 0.0
  %451 = vmatprep.subr.mxu0 0.0
  %452 = vmatpush1.msra.mxu0 0.0
  %453 = vmatprep.subr.mxu0 0.0
  %454 = vmatpush1.msra.mxu0 0.0
  %455 = vmatprep.subr.mxu0 0.0
  %456 = vmatpush1.msra.mxu0 0.0
  %457 = vmatprep.subr.mxu0 0.0
  %458 = vmatpush1.msra.mxu0 0.0
  %459 = vmatprep.subr.mxu0 0.0
  %460 = vmatpush1.msra.mxu0 0.0
  %461 = vmatprep.mubr.f32.mxu0 0.0
  %462 = vmatmul.mubr.f32.gmra.mrb[0].mxu0 %v395
  %v463 = vpop.f32.mrb[0].mxu0
  %v464 = vadd.f32 0.0, %v463
  %v465 = vpop.f32.mrb[0].mxu0
  %466 = vdwg.mxu0
  %v467 = vadd.f32 %v391, %v464
  %v468 = vxor.u32 %v467, 2147483648
  %v469 = vmul.f32 %v468, 1.442695
  %v470 = vpow.pop %v469
  %v471 = vadd.f32 %v470, 1.0
  %v472 = vrcp.pop %v471
  %v473 = vmul.f32 1.0, %v472
  %v474 = vtanh.pop %v467
  %v475 = vmul.f32 %v473, %v382
  %477 = vrot.lane.b32.xlu0 %v474, 64
  %v478 = vpop.permute.xlu0 %477
  %v480 = vmul.f32 %v473, %v478
  %482 = vrot.lane.b32.xlu0 %v480, 32
  %v483 = vpop.permute.xlu0 %482
  %v485 = vadd.f32 %v475, %v483
  %v486 = vtanh.pop %v485
  %488 = vrot.lane.b32.xlu0 %v486, 64
  %v489 = vpop.permute.xlu0 %488
  %v491 = vmul.f32 %v473, %v489
  %v492 = vstv %s390
  %vm493 = vcmp.gt.s32.totalorder %v26, %v492
  %v494 = vsel %vm493, 1, 0
  %495 = vset.pattern.permute.xlu0 0
  %496 = vperm.xlu0 %495, %v494
  %v497 = vpop.permute.xlu0 %496
  %vm498 = vcmp.eq.s32.totalorder %v497, 1
  %v499 = vsel %vm498, %v491, %v381
  %v500 = vsel %vm498, %v485, %v382
  %v501 = vsel %vm498, %v491, 0.0
  %vm502 = vcmask 1048320
  %503 = vst.msk [vmem:[%s3] sm:$0xff] %vm502, %v501
  %s504 = sadd.s32 %s31, 4
  %v505 = vld [vmem:[%s1 + $0x20] sm:$0xff]
  %507 = vrot.lane.b32.xlu0 %v499, 32
  %v508 = vpop.permute.xlu0 %507
  %v509 = vsel %vm33, %v508, 0
  %511 = vmatprep.subr.mxu0 0.0
  %512 = vmatpush1.msra.mxu0 %v27
  %513 = vmatprep.subr.mxu0 0.0
  %514 = vmatpush1.msra.mxu0 %v28
  %515 = vmatprep.subr.mxu0 0.0
  %516 = vmatpush1.msra.mxu0 %v29
  %517 = vmatprep.subr.mxu0 0.0
  %518 = vmatpush1.msra.mxu0 %v30
  %519 = vmatprep.subr.mxu0 0.0
  %520 = vmatpush1.msra.mxu0 0.0
  %521 = vmatprep.subr.mxu0 0.0
  %522 = vmatpush1.msra.mxu0 0.0
  %523 = vmatprep.subr.mxu0 0.0
  %524 = vmatpush1.msra.mxu0 0.0
  %525 = vmatprep.subr.mxu0 0.0
  %526 = vmatpush1.msra.mxu0 0.0
  %527 = vmatprep.subr.mxu0 0.0
  %528 = vmatpush1.msra.mxu0 0.0
  %529 = vmatprep.subr.mxu0 0.0
  %530 = vmatpush1.msra.mxu0 0.0
  %531 = vmatprep.subr.mxu0 0.0
  %532 = vmatpush1.msra.mxu0 0.0
  %533 = vmatprep.subr.mxu0 0.0
  %534 = vmatpush1.msra.mxu0 0.0
  %535 = vmatprep.subr.mxu0 0.0
  %536 = vmatpush1.msra.mxu0 0.0
  %537 = vmatprep.subr.mxu0 0.0
  %538 = vmatpush1.msra.mxu0 0.0
  %539 = vmatprep.subr.mxu0 0.0
  %540 = vmatpush1.msra.mxu0 0.0
  %541 = vmatprep.subr.mxu0 0.0
  %542 = vmatpush1.msra.mxu0 0.0
  %543 = vmatprep.subr.mxu0 0.0
  %544 = vmatpush1.msra.mxu0 0.0
  %545 = vmatprep.subr.mxu0 0.0
  %546 = vmatpush1.msra.mxu0 0.0
  %547 = vmatprep.subr.mxu0 0.0
  %548 = vmatpush1.msra.mxu0 0.0
  %549 = vmatprep.subr.mxu0 0.0
  %550 = vmatpush1.msra.mxu0 0.0
  %551 = vmatprep.subr.mxu0 0.0
  %552 = vmatpush1.msra.mxu0 0.0
  %553 = vmatprep.subr.mxu0 0.0
  %554 = vmatpush1.msra.mxu0 0.0
  %555 = vmatprep.subr.mxu0 0.0
  %556 = vmatpush1.msra.mxu0 0.0
  %557 = vmatprep.subr.mxu0 0.0
  %558 = vmatpush1.msra.mxu0 0.0
  %559 = vmatprep.subr.mxu0 0.0
  %560 = vmatpush1.msra.mxu0 0.0
  %561 = vmatprep.subr.mxu0 0.0
  %562 = vmatpush1.msra.mxu0 0.0
  %563 = vmatprep.subr.mxu0 0.0
  %564 = vmatpush1.msra.mxu0 0.0
  %565 = vmatprep.subr.mxu0 0.0
  %566 = vmatpush1.msra.mxu0 0.0
  %567 = vmatprep.subr.mxu0 0.0
  %568 = vmatpush1.msra.mxu0 0.0
  %569 = vmatprep.subr.mxu0 0.0
  %570 = vmatpush1.msra.mxu0 0.0
  %571 = vmatprep.subr.mxu0 0.0
  %572 = vmatpush1.msra.mxu0 0.0
  %573 = vmatprep.subr.mxu0 0.0
  %574 = vmatpush1.msra.mxu0 0.0
  %575 = vmatprep.mubr.f32.mxu0 0.0
  %576 = vmatmul.mubr.f32.gmra.mrb[0].mxu0 %v509
  %v577 = vpop.f32.mrb[0].mxu0
  %v578 = vadd.f32 0.0, %v577
  %v579 = vpop.f32.mrb[0].mxu0
  %580 = vdwg.mxu0
  %v581 = vadd.f32 %v505, %v578
  %v582 = vxor.u32 %v581, 2147483648
  %v583 = vmul.f32 %v582, 1.442695
  %v584 = vpow.pop %v583
  %v585 = vadd.f32 %v584, 1.0
  %v586 = vrcp.pop %v585
  %v587 = vmul.f32 1.0, %v586
  %v588 = vtanh.pop %v581
  %v589 = vmul.f32 %v587, %v500
  %591 = vrot.lane.b32.xlu0 %v588, 64
  %v592 = vpop.permute.xlu0 %591
  %v594 = vmul.f32 %v587, %v592
  %596 = vrot.lane.b32.xlu0 %v594, 32
  %v597 = vpop.permute.xlu0 %596
  %v599 = vadd.f32 %v589, %v597
  %v600 = vtanh.pop %v599
  %602 = vrot.lane.b32.xlu0 %v600, 64
  %v603 = vpop.permute.xlu0 %602
  %v605 = vmul.f32 %v587, %v603
  %v606 = vstv %s504
  %vm607 = vcmp.gt.s32.totalorder %v26, %v606
  %v608 = vsel %vm607, 1, 0
  %609 = vset.pattern.permute.xlu0 0
  %610 = vperm.xlu0 %609, %v608
  %v611 = vpop.permute.xlu0 %610
  %vm612 = vcmp.eq.s32.totalorder %v611, 1
  %v613 = vsel %vm612, %v605, %v499
  %v614 = vsel %vm612, %v599, %v500
  %v615 = vsel %vm612, %v605, 0.0
  %617 = vrot.lane.b32.xlu0 %v615, 32
  %v618 = vpop.permute.xlu0 %617
  %620 = vst.msk [vmem:[%s3 + $0x8] sm:$0xff] %vm33, %v618
  %s621 = sadd.s32 %s31, 5
  %v622 = vld [vmem:[%s1 + $0x28] sm:$0xff]
  %624 = vrot.lane.b32.xlu0 %v613, 32
  %v625 = vpop.permute.xlu0 %624
  %v626 = vsel %vm33, %v625, 0
  %628 = vmatprep.subr.mxu0 0.0
  %629 = vmatpush1.msra.mxu0 %v27
  %630 = vmatprep.subr.mxu0 0.0
  %631 = vmatpush1.msra.mxu0 %v28
  %632 = vmatprep.subr.mxu0 0.0
  %633 = vmatpush1.msra.mxu0 %v29
  %634 = vmatprep.subr.mxu0 0.0
  %635 = vmatpush1.msra.mxu0 %v30
  %636 = vmatprep.subr.mxu0 0.0
  %637 = vmatpush1.msra.mxu0 0.0
  %638 = vmatprep.subr.mxu0 0.0
  %639 = vmatpush1.msra.mxu0 0.0
  %640 = vmatprep.subr.mxu0 0.0
  %641 = vmatpush1.msra.mxu0 0.0
  %642 = vmatprep.subr.mxu0 0.0
  %643 = vmatpush1.msra.mxu0 0.0
  %644 = vmatprep.subr.mxu0 0.0
  %645 = vmatpush1.msra.mxu0 0.0
  %646 = vmatprep.subr.mxu0 0.0
  %647 = vmatpush1.msra.mxu0 0.0
  %648 = vmatprep.subr.mxu0 0.0
  %649 = vmatpush1.msra.mxu0 0.0
  %650 = vmatprep.subr.mxu0 0.0
  %651 = vmatpush1.msra.mxu0 0.0
  %652 = vmatprep.subr.mxu0 0.0
  %653 = vmatpush1.msra.mxu0 0.0
  %654 = vmatprep.subr.mxu0 0.0
  %655 = vmatpush1.msra.mxu0 0.0
  %656 = vmatprep.subr.mxu0 0.0
  %657 = vmatpush1.msra.mxu0 0.0
  %658 = vmatprep.subr.mxu0 0.0
  %659 = vmatpush1.msra.mxu0 0.0
  %660 = vmatprep.subr.mxu0 0.0
  %661 = vmatpush1.msra.mxu0 0.0
  %662 = vmatprep.subr.mxu0 0.0
  %663 = vmatpush1.msra.mxu0 0.0
  %664 = vmatprep.subr.mxu0 0.0
  %665 = vmatpush1.msra.mxu0 0.0
  %666 = vmatprep.subr.mxu0 0.0
  %667 = vmatpush1.msra.mxu0 0.0
  %668 = vmatprep.subr.mxu0 0.0
  %669 = vmatpush1.msra.mxu0 0.0
  %670 = vmatprep.subr.mxu0 0.0
  %671 = vmatpush1.msra.mxu0 0.0
  %672 = vmatprep.subr.mxu0 0.0
  %673 = vmatpush1.msra.mxu0 0.0
  %674 = vmatprep.subr.mxu0 0.0
  %675 = vmatpush1.msra.mxu0 0.0
  %676 = vmatprep.subr.mxu0 0.0
  %677 = vmatpush1.msra.mxu0 0.0
  %678 = vmatprep.subr.mxu0 0.0
  %679 = vmatpush1.msra.mxu0 0.0
  %680 = vmatprep.subr.mxu0 0.0
  %681 = vmatpush1.msra.mxu0 0.0
  %682 = vmatprep.subr.mxu0 0.0
  %683 = vmatpush1.msra.mxu0 0.0
  %684 = vmatprep.subr.mxu0 0.0
  %685 = vmatpush1.msra.mxu0 0.0
  %686 = vmatprep.subr.mxu0 0.0
  %687 = vmatpush1.msra.mxu0 0.0
  %688 = vmatprep.subr.mxu0 0.0
  %689 = vmatpush1.msra.mxu0 0.0
  %690 = vmatprep.subr.mxu0 0.0
  %691 = vmatpush1.msra.mxu0 0.0
  %692 = vmatprep.mubr.f32.mxu0 0.0
  %693 = vmatmul.mubr.f32.gmra.mrb[0].mxu0 %v626
  %v694 = vpop.f32.mrb[0].mxu0
  %v695 = vadd.f32 0.0, %v694
  %v696 = vpop.f32.mrb[0].mxu0
  %697 = vdwg.mxu0
  %v698 = vadd.f32 %v622, %v695
  %v699 = vxor.u32 %v698, 2147483648
  %v700 = vmul.f32 %v699, 1.442695
  %v701 = vpow.pop %v700
  %v702 = vadd.f32 %v701, 1.0
  %v703 = vrcp.pop %v702
  %v704 = vmul.f32 1.0, %v703
  %v705 = vtanh.pop %v698
  %v706 = vmul.f32 %v704, %v614
  %708 = vrot.lane.b32.xlu0 %v705, 64
  %v709 = vpop.permute.xlu0 %708
  %v711 = vmul.f32 %v704, %v709
  %713 = vrot.lane.b32.xlu0 %v711, 32
  %v714 = vpop.permute.xlu0 %713
  %v716 = vadd.f32 %v706, %v714
  %v717 = vtanh.pop %v716
  %719 = vrot.lane.b32.xlu0 %v717, 64
  %v720 = vpop.permute.xlu0 %719
  %v722 = vmul.f32 %v704, %v720
  %v723 = vstv %s621
  %vm724 = vcmp.gt.s32.totalorder %v26, %v723
  %v725 = vsel %vm724, 1, 0
  %726 = vset.pattern.permute.xlu0 0
  %727 = vperm.xlu0 %726, %v725
  %v728 = vpop.permute.xlu0 %727
  %vm729 = vcmp.eq.s32.totalorder %v728, 1
  %v730 = vsel %vm729, %v722, %v613
  %v731 = vsel %vm729, %v716, %v614
  %v732 = vsel %vm729, %v722, 0.0
  %734 = vrot.lane.b32.xlu0 %v732, 64
  %v735 = vpop.permute.xlu0 %734
  %737 = vst.msk [vmem:[%s3 + $0x8] sm:$0xff] %vm270, %v735
  %s738 = sadd.s32 %s31, 6
  %v739 = vld [vmem:[%s1 + $0x30] sm:$0xff]
  %741 = vrot.lane.b32.xlu0 %v730, 32
  %v742 = vpop.permute.xlu0 %741
  %v743 = vsel %vm33, %v742, 0
  %745 = vmatprep.subr.mxu0 0.0
  %746 = vmatpush1.msra.mxu0 %v27
  %747 = vmatprep.subr.mxu0 0.0
  %748 = vmatpush1.msra.mxu0 %v28
  %749 = vmatprep.subr.mxu0 0.0
  %750 = vmatpush1.msra.mxu0 %v29
  %751 = vmatprep.subr.mxu0 0.0
  %752 = vmatpush1.msra.mxu0 %v30
  %753 = vmatprep.subr.mxu0 0.0
  %754 = vmatpush1.msra.mxu0 0.0
  %755 = vmatprep.subr.mxu0 0.0
  %756 = vmatpush1.msra.mxu0 0.0
  %757 = vmatprep.subr.mxu0 0.0
  %758 = vmatpush1.msra.mxu0 0.0
  %759 = vmatprep.subr.mxu0 0.0
  %760 = vmatpush1.msra.mxu0 0.0
  %761 = vmatprep.subr.mxu0 0.0
  %762 = vmatpush1.msra.mxu0 0.0
  %763 = vmatprep.subr.mxu0 0.0
  %764 = vmatpush1.msra.mxu0 0.0
  %765 = vmatprep.subr.mxu0 0.0
  %766 = vmatpush1.msra.mxu0 0.0
  %767 = vmatprep.subr.mxu0 0.0
  %768 = vmatpush1.msra.mxu0 0.0
  %769 = vmatprep.subr.mxu0 0.0
  %770 = vmatpush1.msra.mxu0 0.0
  %771 = vmatprep.subr.mxu0 0.0
  %772 = vmatpush1.msra.mxu0 0.0
  %773 = vmatprep.subr.mxu0 0.0
  %774 = vmatpush1.msra.mxu0 0.0
  %775 = vmatprep.subr.mxu0 0.0
  %776 = vmatpush1.msra.mxu0 0.0
  %777 = vmatprep.subr.mxu0 0.0
  %778 = vmatpush1.msra.mxu0 0.0
  %779 = vmatprep.subr.mxu0 0.0
  %780 = vmatpush1.msra.mxu0 0.0
  %781 = vmatprep.subr.mxu0 0.0
  %782 = vmatpush1.msra.mxu0 0.0
  %783 = vmatprep.subr.mxu0 0.0
  %784 = vmatpush1.msra.mxu0 0.0
  %785 = vmatprep.subr.mxu0 0.0
  %786 = vmatpush1.msra.mxu0 0.0
  %787 = vmatprep.subr.mxu0 0.0
  %788 = vmatpush1.msra.mxu0 0.0
  %789 = vmatprep.subr.mxu0 0.0
  %790 = vmatpush1.msra.mxu0 0.0
  %791 = vmatprep.subr.mxu0 0.0
  %792 = vmatpush1.msra.mxu0 0.0
  %793 = vmatprep.subr.mxu0 0.0
  %794 = vmatpush1.msra.mxu0 0.0
  %795 = vmatprep.subr.mxu0 0.0
  %796 = vmatpush1.msra.mxu0 0.0
  %797 = vmatprep.subr.mxu0 0.0
  %798 = vmatpush1.msra.mxu0 0.0
  %799 = vmatprep.subr.mxu0 0.0
  %800 = vmatpush1.msra.mxu0 0.0
  %801 = vmatprep.subr.mxu0 0.0
  %802 = vmatpush1.msra.mxu0 0.0
  %803 = vmatprep.subr.mxu0 0.0
  %804 = vmatpush1.msra.mxu0 0.0
  %805 = vmatprep.subr.mxu0 0.0
  %806 = vmatpush1.msra.mxu0 0.0
  %807 = vmatprep.subr.mxu0 0.0
  %808 = vmatpush1.msra.mxu0 0.0
  %809 = vmatprep.mubr.f32.mxu0 0.0
  %810 = vmatmul.mubr.f32.gmra.mrb[0].mxu0 %v743
  %v811 = vpop.f32.mrb[0].mxu0
  %v812 = vadd.f32 0.0, %v811
  %v813 = vpop.f32.mrb[0].mxu0
  %814 = vdwg.mxu0
  %v815 = vadd.f32 %v739, %v812
  %v816 = vxor.u32 %v815, 2147483648
  %v817 = vmul.f32 %v816, 1.442695
  %v818 = vpow.pop %v817
  %v819 = vadd.f32 %v818, 1.0
  %v820 = vrcp.pop %v819
  %v821 = vmul.f32 1.0, %v820
  %v822 = vtanh.pop %v815
  %v823 = vmul.f32 %v821, %v731
  %825 = vrot.lane.b32.xlu0 %v822, 64
  %v826 = vpop.permute.xlu0 %825
  %v828 = vmul.f32 %v821, %v826
  %830 = vrot.lane.b32.xlu0 %v828, 32
  %v831 = vpop.permute.xlu0 %830
  %v833 = vadd.f32 %v823, %v831
  %v834 = vtanh.pop %v833
  %836 = vrot.lane.b32.xlu0 %v834, 64
  %v837 = vpop.permute.xlu0 %836
  %v839 = vmul.f32 %v821, %v837
  %v840 = vstv %s738
  %vm841 = vcmp.gt.s32.totalorder %v26, %v840
  %v842 = vsel %vm841, 1, 0
  %843 = vset.pattern.permute.xlu0 0
  %844 = vperm.xlu0 %843, %v842
  %v845 = vpop.permute.xlu0 %844
  %vm846 = vcmp.eq.s32.totalorder %v845, 1
  %v847 = vsel %vm846, %v839, %v730
  %v848 = vsel %vm846, %v833, %v731
  %v849 = vsel %vm846, %v839, 0.0
  %851 = vrot.lane.b32.xlu0 %v849, 96
  %v852 = vpop.permute.xlu0 %851
  %854 = vst.msk [vmem:[%s3 + $0x8] sm:$0xff] %vm388, %v852
  %s855 = sadd.s32 %s31, 7
  %v856 = vld [vmem:[%s1 + $0x38] sm:$0xff]
  %858 = vrot.lane.b32.xlu0 %v847, 32
  %v859 = vpop.permute.xlu0 %858
  %v860 = vsel %vm33, %v859, 0
  %862 = vmatprep.subr.mxu0 0.0
  %863 = vmatpush1.msra.mxu0 %v27
  %864 = vmatprep.subr.mxu0 0.0
  %865 = vmatpush1.msra.mxu0 %v28
  %866 = vmatprep.subr.mxu0 0.0
  %867 = vmatpush1.msra.mxu0 %v29
  %868 = vmatprep.subr.mxu0 0.0
  %869 = vmatpush1.msra.mxu0 %v30
  %870 = vmatprep.subr.mxu0 0.0
  %871 = vmatpush1.msra.mxu0 0.0
  %872 = vmatprep.subr.mxu0 0.0
  %873 = vmatpush1.msra.mxu0 0.0
  %874 = vmatprep.subr.mxu0 0.0
  %875 = vmatpush1.msra.mxu0 0.0
  %876 = vmatprep.subr.mxu0 0.0
  %877 = vmatpush1.msra.mxu0 0.0
  %878 = vmatprep.subr.mxu0 0.0
  %879 = vmatpush1.msra.mxu0 0.0
  %880 = vmatprep.subr.mxu0 0.0
  %881 = vmatpush1.msra.mxu0 0.0
  %882 = vmatprep.subr.mxu0 0.0
  %883 = vmatpush1.msra.mxu0 0.0
  %884 = vmatprep.subr.mxu0 0.0
  %885 = vmatpush1.msra.mxu0 0.0
  %886 = vmatprep.subr.mxu0 0.0
  %887 = vmatpush1.msra.mxu0 0.0
  %888 = vmatprep.subr.mxu0 0.0
  %889 = vmatpush1.msra.mxu0 0.0
  %890 = vmatprep.subr.mxu0 0.0
  %891 = vmatpush1.msra.mxu0 0.0
  %892 = vmatprep.subr.mxu0 0.0
  %893 = vmatpush1.msra.mxu0 0.0
  %894 = vmatprep.subr.mxu0 0.0
  %895 = vmatpush1.msra.mxu0 0.0
  %896 = vmatprep.subr.mxu0 0.0
  %897 = vmatpush1.msra.mxu0 0.0
  %898 = vmatprep.subr.mxu0 0.0
  %899 = vmatpush1.msra.mxu0 0.0
  %900 = vmatprep.subr.mxu0 0.0
  %901 = vmatpush1.msra.mxu0 0.0
  %902 = vmatprep.subr.mxu0 0.0
  %903 = vmatpush1.msra.mxu0 0.0
  %904 = vmatprep.subr.mxu0 0.0
  %905 = vmatpush1.msra.mxu0 0.0
  %906 = vmatprep.subr.mxu0 0.0
  %907 = vmatpush1.msra.mxu0 0.0
  %908 = vmatprep.subr.mxu0 0.0
  %909 = vmatpush1.msra.mxu0 0.0
  %910 = vmatprep.subr.mxu0 0.0
  %911 = vmatpush1.msra.mxu0 0.0
  %912 = vmatprep.subr.mxu0 0.0
  %913 = vmatpush1.msra.mxu0 0.0
  %914 = vmatprep.subr.mxu0 0.0
  %915 = vmatpush1.msra.mxu0 0.0
  %916 = vmatprep.subr.mxu0 0.0
  %917 = vmatpush1.msra.mxu0 0.0
  %918 = vmatprep.subr.mxu0 0.0
  %919 = vmatpush1.msra.mxu0 0.0
  %920 = vmatprep.subr.mxu0 0.0
  %921 = vmatpush1.msra.mxu0 0.0
  %922 = vmatprep.subr.mxu0 0.0
  %923 = vmatpush1.msra.mxu0 0.0
  %924 = vmatprep.subr.mxu0 0.0
  %925 = vmatpush1.msra.mxu0 0.0
  %926 = vmatprep.mubr.f32.mxu0 0.0
  %927 = vmatmul.mubr.f32.gmra.mrb[0].mxu0 %v860
  %v928 = vpop.f32.mrb[0].mxu0
  %v929 = vadd.f32 0.0, %v928
  %v930 = vpop.f32.mrb[0].mxu0
  %931 = vdwg.mxu0
  %v932 = vadd.f32 %v856, %v929
  %v933 = vxor.u32 %v932, 2147483648
  %v934 = vmul.f32 %v933, 1.442695
  %v935 = vpow.pop %v934
  %v936 = vadd.f32 %v935, 1.0
  %v937 = vrcp.pop %v936
  %v938 = vmul.f32 1.0, %v937
  %v939 = vtanh.pop %v932
  %v940 = vmul.f32 %v938, %v848
  %942 = vrot.lane.b32.xlu0 %v939, 64
  %v943 = vpop.permute.xlu0 %942
  %v945 = vmul.f32 %v938, %v943
  %947 = vrot.lane.b32.xlu0 %v945, 32
  %v948 = vpop.permute.xlu0 %947
  %v950 = vadd.f32 %v940, %v948
  %v951 = vtanh.pop %v950
  %953 = vrot.lane.b32.xlu0 %v951, 64
  %v954 = vpop.permute.xlu0 %953
  %v956 = vmul.f32 %v938, %v954
  %v957 = vstv %s855
  %vm958 = vcmp.gt.s32.totalorder %v26, %v957
  %v959 = vsel %vm958, 1, 0
  %960 = vset.pattern.permute.xlu0 0
  %961 = vperm.xlu0 %960, %v959
  %v962 = vpop.permute.xlu0 %961
  %vm963 = vcmp.eq.s32.totalorder %v962, 1
  %v964 = vsel %vm963, %v956, %v847
  %v965 = vsel %vm963, %v950, %v848
  %v966 = vsel %vm963, %v956, 0.0
  %967 = vst.msk [vmem:[%s3 + $0x8] sm:$0xff] %vm502, %v966
  %969 = vrot.lane.b32.xlu0 %v964, 32
  %v970 = vpop.permute.xlu0 %969
  %972 = vst.msk [vmem:[%s4] sm:$0xff] %vm33, %v970
  %974 = vrot.lane.b32.xlu0 %v965, 96
  %v975 = vpop.permute.xlu0 %974
  %977 = vst.msk [vmem:[%s5] sm:$0xff] %vm33, %v975
  // Predicated region
  $region18: #{rnn_forward.1} parent=0 // pred_check
    _
  $region19: #{rnn_forward.1} parent=0 // pred_check_branch
    %979 = sbr.rel (0) target = $region21
  $region20: #{rnn_forward.1} parent=0 // pred_region
    _
  $region21: #{rnn_forward.1} parent=0 // pred_fallthru
    _
  // Predicated region
  $region22: #{rnn_forward.1} parent=0 // pred_check
    _
  $region23: #{rnn_forward.1} parent=0 // pred_check_branch
    %981 = sbr.rel (0) target = $region25
  $region24: #{rnn_forward.1} parent=0 // pred_region
    _
  $region25: #{rnn_forward.1} parent=0 // pred_fallthru
    _
  // Predicated region
  $region26: #{rnn_forward.1} parent=0 // pred_check
    _
  $region27: #{rnn_forward.1} parent=0 // pred_check_branch
    %983 = sbr.rel (0) target = $region29
  $region28: #{rnn_forward.1} parent=0 // pred_region
    _
  $region29: #{rnn_forward.1} parent=0 // pred_fallthru
    _
  // Predicated region
  $region30: #{rnn_forward.1} parent=0 // pred_check
    _
  $region31: #{rnn_forward.1} parent=0 // pred_check_branch
    %985 = sbr.rel (0) target = $region33
  $region32: #{rnn_forward.1} parent=0 // pred_region
    _
  $region33: #{rnn_forward.1} parent=0 // pred_fallthru
    _
  // Predicated region
  $region34: #{rnn_forward.1} parent=0 // pred_check
    _
  $region35: #{rnn_forward.1} parent=0 // pred_check_branch
    %987 = sbr.rel (0) target = $region37
  $region36: #{rnn_forward.1} parent=0 // pred_region
    _
  $region37: #{rnn_forward.1} parent=0 // pred_fallthru
    _
  // Predicated region
  $region38: #{rnn_forward.1} parent=0 // pred_check
    _
  $region39: #{rnn_forward.1} parent=0 // pred_check_branch
    %989 = sbr.rel (0) target = $region41
  $region40: #{rnn_forward.1} parent=0 // pred_region
    _
  $region41: #{rnn_forward.1} parent=0 // pred_fallthru
    _

</llo_original>
